<compile_context>
chip_gen: v5e
topology: v5e:2x2
jax: 0.10.0
libtpu: 0.0.40
codegen_flags: <defaults>
</compile_context>

<pallas_src>
import functools

import numpy as np
import jax
import jax.numpy as jnp
from jax import lax
from jax.experimental import pallas as pl
from jax.experimental.pallas import tpu as pltpu


# ---------------------------------------------------------------------------
# Fused kernel: one batch item per grid step.
# ---------------------------------------------------------------------------
def _fused_upcat_conv_kernel(x_ref, xh_ref, ut_ref, w1_ref, w2_ref, o_ref, *, width):
    """x_ref : (C, H*W)        skip connection, bf16, flat spatial on lanes
       xh_ref: (C, Hh*Wh)      half-resolution input to upsample, bf16
       ut_ref: (Hh*Wh, H*W)    constant bilinear upsample/interleave matrix, bf16
       w1_ref: (9, Cout, 2C)   stage-1 conv weights, one (Cout, Cin) matrix per tap
       w2_ref: (9, Cout, Cout) stage-2 conv weights
       o_ref : (Cout, H*W)     output, f32, lane-dense and already NCHW-ordered
    """
    _, hw = x_ref.shape
    cout = o_ref.shape[0]
    w = width

    # ---- fused 2x bilinear upsample: one small MXU matmul (weights exact in bf16).
    xu = jnp.dot(xh_ref[...], ut_ref[...],
                 preferred_element_type=jnp.float32).astype(jnp.bfloat16)

    # ---- torch.cat([x, upsampled], dim=1): stays a bf16 VMEM value, never hits HBM.
    cat = jnp.concatenate([x_ref[...], xu], axis=0)                 # (2C, H*W)

    # Row-boundary masks for the horizontal taps (dw = -1 / +1), built once and
    # shared by both conv stages.
    wcol = lax.broadcasted_iota(jnp.int32, (1, hw), 1) % w
    masks = {-1: (wcol >= 1).astype(jnp.bfloat16),
             0: None,
             1: (wcol <= w - 2).astype(jnp.bfloat16)}

    def shift_flat(src, off):
        # out[:, p] = src[:, p + off], zero-filled beyond the flat extent
        # (handles the conv's H-direction zero padding exactly).
        if off == 0:
            return src
        cin = src.shape[0]
        if off > 0:
            pad = jnp.zeros((cin, off), src.dtype)
            return jnp.concatenate([src[:, off:], pad], axis=1)
        pad = jnp.zeros((cin, -off), src.dtype)
        return jnp.concatenate([pad, src[:, :off]], axis=1)

    def conv3x3_in_relu(src, w_ref):
        # 3x3 conv (padding=1, bias=False) as 9 accumulated K=Cin matmuls over
        # shifted taps -> no im2col patch, output produced directly as (Cout, H*W).
        acc = jnp.zeros((cout, hw), jnp.float32)
        t = 0
        for dh in (-1, 0, 1):
            for dw in (-1, 0, 1):
                tap = shift_flat(src, dh * w + dw)
                if masks[dw] is not None:
                    tap = tap * masks[dw]              # zero the wrapped columns
                acc = acc + jnp.dot(w_ref[t], tap,
                                    preferred_element_type=jnp.float32)
                t += 1
        # InstanceNorm2d (affine=False, eps=1e-5), two-pass variance, then ReLU.
        mean = jnp.mean(acc, axis=1, keepdims=True)
        cen = acc - mean
        var = jnp.mean(cen * cen, axis=1, keepdims=True)
        y = cen * lax.rsqrt(var + 1e-5)
        return jnp.maximum(y, 0.0)

    h1 = conv3x3_in_relu(cat, w1_ref)                       # (Cout, H*W) f32, in VMEM
    y = conv3x3_in_relu(h1.astype(jnp.bfloat16), w2_ref)    # (Cout, H*W) f32
    o_ref[...] = y.astype(o_ref.dtype)


# ---------------------------------------------------------------------------
# Host-side constants / helpers
# ---------------------------------------------------------------------------
def _upsample_matrix_1d(n_in):
    """(2*n_in, n_in) matrix of PyTorch bilinear x2 (align_corners=False) weights."""
    i = np.arange(2 * n_in, dtype=np.float64)
    src = np.clip((i + 0.5) * 0.5 - 0.5, 0.0, n_in - 1)
    i0 = np.floor(src).astype(np.int64)
    i1 = np.minimum(i0 + 1, n_in - 1)
    frac = src - i0
    u = np.zeros((2 * n_in, n_in), np.float32)
    u[np.arange(2 * n_in), i0] += 1.0 - frac
    u[np.arange(2 * n_in), i1] += frac
    return u


def _pick_vmem_limit_bytes():
    # Raise the scoped-VMEM limit toward physical capacity (16/32 MiB defaults on
    # v5e/v6e throttle tile sizes) while staying inside v7x's 64 MiB.
    try:
        cap = pltpu.get_tpu_info().vmem_capacity_bytes
        return int(min(max(cap * 4 // 5, 32 * 1024 * 1024), 112 * 1024 * 1024))
    except Exception:
        return 48 * 1024 * 1024


# ---------------------------------------------------------------------------
# Module forward (NCHW in / NCHW out, like the PyTorch module)
# ---------------------------------------------------------------------------
def upsampling_concat(x_to_upsample, x, w1, w2):
    """x_to_upsample: (N, C, H/2, W/2) f32; x: (N, C, H, W) f32
       w1: (3, 3, 2C, Cout) f32 HWIO; w2: (3, 3, Cout, Cout) f32 HWIO
       returns (N, Cout, H, W) f32."""
    n, c, h, w = x.shape
    hh, wh = x_to_upsample.shape[2], x_to_upsample.shape[3]
    assert (h, w) == (2 * hh, 2 * wh)
    cout = w1.shape[-1]
    hw = h * w

    # Flat-spatial lane-dense views; reshapes of contiguous trailing dims are cheap.
    xs = x.reshape(n, c, hw).astype(jnp.bfloat16)
    xh = x_to_upsample.reshape(n, c, hh * wh).astype(jnp.bfloat16)

    # Constant 2x-bilinear upsample + interleave matrix (entries in {0, 1/16, 3/16,
    # 9/16, 1/4, 3/4, 1} -- all exact in bf16).  Grid-invariant -> DMA'd once.
    # TODO(synk): for large H*W replace this dense (Hh*Wh, H*W) matrix with a
    # separable row/column stencil plus a spatially tiled grid (streamed InstanceNorm
    # stats), which is also what the v7x 64 MiB VMEM budget needs at production shapes.
    ut = jnp.asarray(np.kron(_upsample_matrix_1d(hh), _upsample_matrix_1d(wh)).T,
                     dtype=jnp.bfloat16)

    # Per-tap (Cout, Cin) weight matrices, tap index t = kh*3 + kw.
    w1_taps = jnp.transpose(w1, (0, 1, 3, 2)).reshape(9, cout, 2 * c).astype(jnp.bfloat16)
    w2_taps = jnp.transpose(w2, (0, 1, 3, 2)).reshape(9, cout, cout).astype(jnp.bfloat16)

    kernel = functools.partial(_fused_upcat_conv_kernel, width=w)

    # One grid step per batch item; "parallel" lets v7x shard the batch over its two
    # TensorCores.  (For very small per-item work, several items could be folded into
    # one step to amortize the ~0.35us/step overhead.)
    out = pl.pallas_call(
        kernel,
        out_shape=jax.ShapeDtypeStruct((n, cout, hw), jnp.float32),
        grid=(n,),
        in_specs=[
            pl.BlockSpec((None, c, hw), lambda b: (b, 0, 0)),
            pl.BlockSpec((None, c, hh * wh), lambda b: (b, 0, 0)),
            pl.BlockSpec((hh * wh, hw), lambda b: (0, 0)),        # grid-invariant
            pl.BlockSpec((9, cout, 2 * c), lambda b: (0, 0, 0)),  # grid-invariant
            pl.BlockSpec((9, cout, cout), lambda b: (0, 0, 0)),   # grid-invariant
        ],
        out_specs=pl.BlockSpec((None, cout, hw), lambda b: (b, 0, 0)),
        compiler_params=pltpu.CompilerParams(
            dimension_semantics=("parallel",),
            vmem_limit_bytes=_pick_vmem_limit_bytes(),
        ),
    )(xs, xh, ut, w1_taps, w2_taps)

    # (N, Cout, H*W) is already NCHW element order -> metadata-only reshape.
    return out.reshape(n, cout, h, w)


# ---------------------------------------------------------------------------
# Pure-JAX reference (f32 math mirroring the kernel's bf16 input quantization)
# ---------------------------------------------------------------------------
def _reference_forward(x_to_upsample, x, w1, w2):
    f32, bf16 = jnp.float32, jnp.bfloat16

    def up2x(t):
        _, _, hh, wh = t.shape

        def iw(n_in):
            i = jnp.arange(2 * n_in, dtype=f32)
            src = jnp.clip((i + 0.5) * 0.5 - 0.5, 0.0, n_in - 1.0)
            i0 = jnp.floor(src).astype(jnp.int32)
            i1 = jnp.minimum(i0 + 1, n_in - 1)
            frac = src - i0.astype(f32)
            return i0, i1, 1.0 - frac, frac

        r0, r1, a0, a1 = iw(hh)
        th = (t[:, :, r0, :] * a0[None, None, :, None]
              + t[:, :, r1, :] * a1[None, None, :, None])
        c0, c1, b0, b1 = iw(wh)
        return th[:, :, :, c0] * b0 + th[:, :, :, c1] * b1

    def conv3x3(t, wgt):
        return lax.conv_general_dilated(
            t, wgt, window_strides=(1, 1), padding=((1, 1), (1, 1)),
            dimension_numbers=("NCHW", "HWIO", "NCHW"),
            precision=lax.Precision.HIGHEST)

    def inorm_relu(t):
        mean = jnp.mean(t, axis=(2, 3), keepdims=True)
        var = jnp.mean((t - mean) ** 2, axis=(2, 3), keepdims=True)
        return jnp.maximum((t - mean) * lax.rsqrt(var + 1e-5), 0.0)

    xq = x.astype(bf16).astype(f32)
    uq = up2x(x_to_upsample.astype(bf16).astype(f32)).astype(bf16).astype(f32)
    cat = jnp.concatenate([xq, uq], axis=1)
    w1q = w1.astype(bf16).astype(f32)
    w2q = w2.astype(bf16).astype(f32)
    h1 = inorm_relu(conv3x3(cat, w1q))
    y = inorm_relu(conv3x3(h1.astype(bf16).astype(f32), w2q))
    return y


def init_params(key, in_channels, out_channels):
    k1, k2 = jax.random.split(key)
    w1 = jax.random.normal(k1, (3, 3, in_channels, out_channels), jnp.float32)
    w1 = w1 / jnp.sqrt(9.0 * in_channels)
    w2 = jax.random.normal(k2, (3, 3, out_channels, out_channels), jnp.float32)
    w2 = w2 / jnp.sqrt(9.0 * out_channels)
    return w1, w2


if __name__ == "__main__":
    key = jax.random.PRNGKey(0)
    k_a, k_b, k_w = jax.random.split(key, 3)

    # Small shapes: x is (2, 4, 16, 16); x_to_upsample is half-resolution so the
    # 2x bilinear upsample matches x's spatial size.  in_channels = 4 + 4 = 8.
    N, C, H, W = 2, 4, 16, 16
    out_channels = 8

    x_to_upsample = jax.random.normal(k_a, (N, C, H // 2, W // 2), jnp.float32)
    x = jax.random.normal(k_b, (N, C, H, W), jnp.float32)
    w1, w2 = init_params(k_w, 2 * C, out_channels)

    out = jax.jit(upsampling_concat)(x_to_upsample, x, w1, w2)
    out = jax.block_until_ready(out)

    assert out.shape == (N, out_channels, H, W)
    assert bool(jnp.all(jnp.isfinite(out)))
    assert bool(jnp.all(out >= 0.0))          # final ReLU

    ref = _reference_forward(x_to_upsample, x, w1, w2)
    max_err = float(jnp.max(jnp.abs(out - ref)))
    assert max_err < 5e-2, f"max abs error vs reference: {max_err}"

    print("KERNEL_OK")
</pallas_src>

<mosaic_0001>
module attributes {stable_mosaic.version = 11 : i64} {
  func.func @_fused_upcat_conv_kernel(%arg0: i32, %arg1: memref<1x4x256xbf16, #tpu.memory_space<vmem>>, %arg2: memref<1x4x64xbf16, #tpu.memory_space<vmem>>, %arg3: memref<64x256xbf16, #tpu.memory_space<vmem>>, %arg4: memref<9x8x8xbf16, #tpu.memory_space<vmem>>, %arg5: memref<9x8x8xbf16, #tpu.memory_space<vmem>>, %arg6: memref<1x8x256xf32, #tpu.memory_space<vmem>>) attributes {dimension_semantics = [#tpu.dimension_semantics<parallel>], iteration_bounds = array<i64: 2>, scalar_prefetch = 0 : i64, scratch_operands = 0 : i64, tpu.core_type = #tpu.core_type<tc>, window_params = [{transform_indices = @transform_0, window_bounds = array<i64: 1, 4, 256>}, {transform_indices = @transform_1, window_bounds = array<i64: 1, 4, 64>}, {pipeline_mode = #tpu.pipeline_mode<synchronous>, transform_indices = @transform_2, window_bounds = array<i64: 64, 256>}, {pipeline_mode = #tpu.pipeline_mode<synchronous>, transform_indices = @transform_3, window_bounds = array<i64: 9, 8, 8>}, {pipeline_mode = #tpu.pipeline_mode<synchronous>, transform_indices = @transform_4, window_bounds = array<i64: 9, 8, 8>}, {transform_indices = @transform_5, window_bounds = array<i64: 1, 8, 256>}]} {
    %c0 = arith.constant 0 : index
    %c0_0 = arith.constant 0 : index
    %c0_1 = arith.constant 0 : index
    %0 = vector.load %arg2[%c0, %c0_0, %c0_1] : memref<1x4x64xbf16, #tpu.memory_space<vmem>>, vector<1x4x64xbf16>
    %1 = vector.shape_cast %0 : vector<1x4x64xbf16> to vector<4x64xbf16>
    %c0_2 = arith.constant 0 : index
    %c0_3 = arith.constant 0 : index
    %2 = vector.load %arg3[%c0_2, %c0_3] : memref<64x256xbf16, #tpu.memory_space<vmem>>, vector<64x256xbf16>
    %cst = arith.constant dense<0.000000e+00> : vector<4x256xf32>
    %3 = tpu.matmul %1, %2, %cst {dimension_numbers = #tpu.dot_dimension_numbers<[1], [0], [0], [1], [0, 0, 1, 1], [], []>} : vector<4x64xbf16>, vector<64x256xbf16>, vector<4x256xf32> -> vector<4x256xf32>
    %4 = arith.truncf %3 : vector<4x256xf32> to vector<4x256xbf16>
    %c0_4 = arith.constant 0 : index
    %c0_5 = arith.constant 0 : index
    %c0_6 = arith.constant 0 : index
    %5 = vector.load %arg1[%c0_4, %c0_5, %c0_6] : memref<1x4x256xbf16, #tpu.memory_space<vmem>>, vector<1x4x256xbf16>
    %6 = vector.shape_cast %5 : vector<1x4x256xbf16> to vector<4x256xbf16>
    %7 = tpu.concatenate %6, %4 in 0 : vector<4x256xbf16>, vector<4x256xbf16> -> vector<8x256xbf16>
    %8 = tpu.iota {dimensions = array<i32: 1>} : vector<1x256xi32>
    %c16_i32 = arith.constant 16 : i32
    %c0_i32 = arith.constant 0 : i32
    %9 = arith.cmpi eq, %c16_i32, %c0_i32 : i32
    %c1_i32 = arith.constant 1 : i32
    %10 = arith.select %9, %c1_i32, %c16_i32 : i32
    %11 = vector.broadcast %10 : i32 to vector<1x256xi32>
    %12 = arith.remsi %8, %11 : vector<1x256xi32>
    %c0_i32_7 = arith.constant 0 : i32
    %13 = vector.broadcast %c0_i32_7 : i32 to vector<1x256xi32>
    %14 = arith.cmpi ne, %12, %13 : vector<1x256xi32>
    %c0_i32_8 = arith.constant 0 : i32
    %15 = vector.broadcast %c0_i32_8 : i32 to vector<1x256xi32>
    %16 = arith.cmpi slt, %12, %15 : vector<1x256xi32>
    %c0_i32_9 = arith.constant 0 : i32
    %17 = arith.cmpi slt, %10, %c0_i32_9 : i32
    %18 = vector.broadcast %17 : i1 to vector<1x256xi1>
    %19 = vector.broadcast %18 : vector<1x256xi1> to vector<1x256xi1>
    %20 = arith.xori %16, %19 : vector<1x256xi1>
    %21 = arith.andi %20, %14 : vector<1x256xi1>
    %22 = vector.broadcast %10 : i32 to vector<1x256xi32>
    %23 = arith.addi %12, %22 : vector<1x256xi32>
    %24 = arith.select %21, %23, %12 : vector<1x256xi1>, vector<1x256xi32>
    %c1_i32_10 = arith.constant 1 : i32
    %25 = vector.broadcast %c1_i32_10 : i32 to vector<1x256xi32>
    %26 = arith.cmpi sge, %24, %25 : vector<1x256xi32>
    %27 = arith.extui %26 : vector<1x256xi1> to vector<1x256xi32>
    %28 = arith.sitofp %27 : vector<1x256xi32> to vector<1x256xf32>
    %29 = arith.truncf %28 : vector<1x256xf32> to vector<1x256xbf16>
    %c14_i32 = arith.constant 14 : i32
    %30 = vector.broadcast %c14_i32 : i32 to vector<1x256xi32>
    %31 = arith.cmpi sle, %24, %30 : vector<1x256xi32>
    %32 = arith.extui %31 : vector<1x256xi1> to vector<1x256xi32>
    %33 = arith.sitofp %32 : vector<1x256xi32> to vector<1x256xf32>
    %34 = arith.truncf %33 : vector<1x256xf32> to vector<1x256xbf16>
    %cst_11 = arith.constant 0.000000e+00 : f32
    %35 = vector.broadcast %cst_11 : f32 to vector<8x256xf32>
    %cst_12 = arith.constant 0.000000e+00 : bf16
    %36 = vector.broadcast %cst_12 : bf16 to vector<8x17xbf16>
    %37 = vector.extract_strided_slice %7 {offsets = [0, 0], sizes = [8, 239], strides = [1, 1]} : vector<8x256xbf16> to vector<8x239xbf16>
    %38 = tpu.concatenate %36, %37 in 1 : vector<8x17xbf16>, vector<8x239xbf16> -> vector<8x256xbf16>
    %39 = vector.broadcast %29 : vector<1x256xbf16> to vector<8x256xbf16>
    %40 = arith.mulf %38, %39 : vector<8x256xbf16>
    %c0_13 = arith.constant 0 : index
    %c0_14 = arith.constant 0 : index
    %c0_15 = arith.constant 0 : index
    %41 = vector.load %arg4[%c0_13, %c0_14, %c0_15] : memref<9x8x8xbf16, #tpu.memory_space<vmem>>, vector<1x8x8xbf16>
    %42 = vector.shape_cast %41 : vector<1x8x8xbf16> to vector<8x8xbf16>
    %cst_16 = arith.constant dense<0.000000e+00> : vector<8x256xf32>
    %43 = tpu.matmul %42, %40, %cst_16 {dimension_numbers = #tpu.dot_dimension_numbers<[1], [0], [0], [1], [0, 0, 1, 1], [], []>} : vector<8x8xbf16>, vector<8x256xbf16>, vector<8x256xf32> -> vector<8x256xf32>
    %44 = arith.addf %35, %43 : vector<8x256xf32>
    %cst_17 = arith.constant 0.000000e+00 : bf16
    %45 = vector.broadcast %cst_17 : bf16 to vector<8x16xbf16>
    %46 = vector.extract_strided_slice %7 {offsets = [0, 0], sizes = [8, 240], strides = [1, 1]} : vector<8x256xbf16> to vector<8x240xbf16>
    %47 = tpu.concatenate %45, %46 in 1 : vector<8x16xbf16>, vector<8x240xbf16> -> vector<8x256xbf16>
    %c1 = arith.constant 1 : index
    %c0_18 = arith.constant 0 : index
    %c0_19 = arith.constant 0 : index
    %48 = vector.load %arg4[%c1, %c0_18, %c0_19] : memref<9x8x8xbf16, #tpu.memory_space<vmem>>, vector<1x8x8xbf16>
    %49 = vector.shape_cast %48 : vector<1x8x8xbf16> to vector<8x8xbf16>
    %cst_20 = arith.constant dense<0.000000e+00> : vector<8x256xf32>
    %50 = tpu.matmul %49, %47, %cst_20 {dimension_numbers = #tpu.dot_dimension_numbers<[1], [0], [0], [1], [0, 0, 1, 1], [], []>} : vector<8x8xbf16>, vector<8x256xbf16>, vector<8x256xf32> -> vector<8x256xf32>
    %51 = arith.addf %44, %50 : vector<8x256xf32>
    %cst_21 = arith.constant 0.000000e+00 : bf16
    %52 = vector.broadcast %cst_21 : bf16 to vector<8x15xbf16>
    %53 = vector.extract_strided_slice %7 {offsets = [0, 0], sizes = [8, 241], strides = [1, 1]} : vector<8x256xbf16> to vector<8x241xbf16>
    %54 = tpu.concatenate %52, %53 in 1 : vector<8x15xbf16>, vector<8x241xbf16> -> vector<8x256xbf16>
    %55 = vector.broadcast %34 : vector<1x256xbf16> to vector<8x256xbf16>
    %56 = arith.mulf %54, %55 : vector<8x256xbf16>
    %c2 = arith.constant 2 : index
    %c0_22 = arith.constant 0 : index
    %c0_23 = arith.constant 0 : index
    %57 = vector.load %arg4[%c2, %c0_22, %c0_23] : memref<9x8x8xbf16, #tpu.memory_space<vmem>>, vector<1x8x8xbf16>
    %58 = vector.shape_cast %57 : vector<1x8x8xbf16> to vector<8x8xbf16>
    %cst_24 = arith.constant dense<0.000000e+00> : vector<8x256xf32>
    %59 = tpu.matmul %58, %56, %cst_24 {dimension_numbers = #tpu.dot_dimension_numbers<[1], [0], [0], [1], [0, 0, 1, 1], [], []>} : vector<8x8xbf16>, vector<8x256xbf16>, vector<8x256xf32> -> vector<8x256xf32>
    %60 = arith.addf %51, %59 : vector<8x256xf32>
    %cst_25 = arith.constant 0.000000e+00 : bf16
    %61 = vector.broadcast %cst_25 : bf16 to vector<8x1xbf16>
    %62 = vector.extract_strided_slice %7 {offsets = [0, 0], sizes = [8, 255], strides = [1, 1]} : vector<8x256xbf16> to vector<8x255xbf16>
    %63 = tpu.concatenate %61, %62 in 1 : vector<8x1xbf16>, vector<8x255xbf16> -> vector<8x256xbf16>
    %64 = vector.broadcast %29 : vector<1x256xbf16> to vector<8x256xbf16>
    %65 = arith.mulf %63, %64 : vector<8x256xbf16>
    %c3 = arith.constant 3 : index
    %c0_26 = arith.constant 0 : index
    %c0_27 = arith.constant 0 : index
    %66 = vector.load %arg4[%c3, %c0_26, %c0_27] : memref<9x8x8xbf16, #tpu.memory_space<vmem>>, vector<1x8x8xbf16>
    %67 = vector.shape_cast %66 : vector<1x8x8xbf16> to vector<8x8xbf16>
    %cst_28 = arith.constant dense<0.000000e+00> : vector<8x256xf32>
    %68 = tpu.matmul %67, %65, %cst_28 {dimension_numbers = #tpu.dot_dimension_numbers<[1], [0], [0], [1], [0, 0, 1, 1], [], []>} : vector<8x8xbf16>, vector<8x256xbf16>, vector<8x256xf32> -> vector<8x256xf32>
    %69 = arith.addf %60, %68 : vector<8x256xf32>
    %c4 = arith.constant 4 : index
    %c0_29 = arith.constant 0 : index
    %c0_30 = arith.constant 0 : index
    %70 = vector.load %arg4[%c4, %c0_29, %c0_30] : memref<9x8x8xbf16, #tpu.memory_space<vmem>>, vector<1x8x8xbf16>
    %71 = vector.shape_cast %70 : vector<1x8x8xbf16> to vector<8x8xbf16>
    %cst_31 = arith.constant dense<0.000000e+00> : vector<8x256xf32>
    %72 = tpu.matmul %71, %7, %cst_31 {dimension_numbers = #tpu.dot_dimension_numbers<[1], [0], [0], [1], [0, 0, 1, 1], [], []>} : vector<8x8xbf16>, vector<8x256xbf16>, vector<8x256xf32> -> vector<8x256xf32>
    %73 = arith.addf %69, %72 : vector<8x256xf32>
    %cst_32 = arith.constant 0.000000e+00 : bf16
    %74 = vector.broadcast %cst_32 : bf16 to vector<8x1xbf16>
    %75 = vector.extract_strided_slice %7 {offsets = [0, 1], sizes = [8, 255], strides = [1, 1]} : vector<8x256xbf16> to vector<8x255xbf16>
    %76 = tpu.concatenate %75, %74 in 1 : vector<8x255xbf16>, vector<8x1xbf16> -> vector<8x256xbf16>
    %77 = vector.broadcast %34 : vector<1x256xbf16> to vector<8x256xbf16>
    %78 = arith.mulf %76, %77 : vector<8x256xbf16>
    %c5 = arith.constant 5 : index
    %c0_33 = arith.constant 0 : index
    %c0_34 = arith.constant 0 : index
    %79 = vector.load %arg4[%c5, %c0_33, %c0_34] : memref<9x8x8xbf16, #tpu.memory_space<vmem>>, vector<1x8x8xbf16>
    %80 = vector.shape_cast %79 : vector<1x8x8xbf16> to vector<8x8xbf16>
    %cst_35 = arith.constant dense<0.000000e+00> : vector<8x256xf32>
    %81 = tpu.matmul %80, %78, %cst_35 {dimension_numbers = #tpu.dot_dimension_numbers<[1], [0], [0], [1], [0, 0, 1, 1], [], []>} : vector<8x8xbf16>, vector<8x256xbf16>, vector<8x256xf32> -> vector<8x256xf32>
    %82 = arith.addf %73, %81 : vector<8x256xf32>
    %cst_36 = arith.constant 0.000000e+00 : bf16
    %83 = vector.broadcast %cst_36 : bf16 to vector<8x15xbf16>
    %84 = vector.extract_strided_slice %7 {offsets = [0, 15], sizes = [8, 241], strides = [1, 1]} : vector<8x256xbf16> to vector<8x241xbf16>
    %85 = tpu.concatenate %84, %83 in 1 : vector<8x241xbf16>, vector<8x15xbf16> -> vector<8x256xbf16>
    %86 = vector.broadcast %29 : vector<1x256xbf16> to vector<8x256xbf16>
    %87 = arith.mulf %85, %86 : vector<8x256xbf16>
    %c6 = arith.constant 6 : index
    %c0_37 = arith.constant 0 : index
    %c0_38 = arith.constant 0 : index
    %88 = vector.load %arg4[%c6, %c0_37, %c0_38] : memref<9x8x8xbf16, #tpu.memory_space<vmem>>, vector<1x8x8xbf16>
    %89 = vector.shape_cast %88 : vector<1x8x8xbf16> to vector<8x8xbf16>
    %cst_39 = arith.constant dense<0.000000e+00> : vector<8x256xf32>
    %90 = tpu.matmul %89, %87, %cst_39 {dimension_numbers = #tpu.dot_dimension_numbers<[1], [0], [0], [1], [0, 0, 1, 1], [], []>} : vector<8x8xbf16>, vector<8x256xbf16>, vector<8x256xf32> -> vector<8x256xf32>
    %91 = arith.addf %82, %90 : vector<8x256xf32>
    %cst_40 = arith.constant 0.000000e+00 : bf16
    %92 = vector.broadcast %cst_40 : bf16 to vector<8x16xbf16>
    %93 = vector.extract_strided_slice %7 {offsets = [0, 16], sizes = [8, 240], strides = [1, 1]} : vector<8x256xbf16> to vector<8x240xbf16>
    %94 = tpu.concatenate %93, %92 in 1 : vector<8x240xbf16>, vector<8x16xbf16> -> vector<8x256xbf16>
    %c7 = arith.constant 7 : index
    %c0_41 = arith.constant 0 : index
    %c0_42 = arith.constant 0 : index
    %95 = vector.load %arg4[%c7, %c0_41, %c0_42] : memref<9x8x8xbf16, #tpu.memory_space<vmem>>, vector<1x8x8xbf16>
    %96 = vector.shape_cast %95 : vector<1x8x8xbf16> to vector<8x8xbf16>
    %cst_43 = arith.constant dense<0.000000e+00> : vector<8x256xf32>
    %97 = tpu.matmul %96, %94, %cst_43 {dimension_numbers = #tpu.dot_dimension_numbers<[1], [0], [0], [1], [0, 0, 1, 1], [], []>} : vector<8x8xbf16>, vector<8x256xbf16>, vector<8x256xf32> -> vector<8x256xf32>
    %98 = arith.addf %91, %97 : vector<8x256xf32>
    %cst_44 = arith.constant 0.000000e+00 : bf16
    %99 = vector.broadcast %cst_44 : bf16 to vector<8x17xbf16>
    %100 = vector.extract_strided_slice %7 {offsets = [0, 17], sizes = [8, 239], strides = [1, 1]} : vector<8x256xbf16> to vector<8x239xbf16>
    %101 = tpu.concatenate %100, %99 in 1 : vector<8x239xbf16>, vector<8x17xbf16> -> vector<8x256xbf16>
    %102 = vector.broadcast %34 : vector<1x256xbf16> to vector<8x256xbf16>
    %103 = arith.mulf %101, %102 : vector<8x256xbf16>
    %c8 = arith.constant 8 : index
    %c0_45 = arith.constant 0 : index
    %c0_46 = arith.constant 0 : index
    %104 = vector.load %arg4[%c8, %c0_45, %c0_46] : memref<9x8x8xbf16, #tpu.memory_space<vmem>>, vector<1x8x8xbf16>
    %105 = vector.shape_cast %104 : vector<1x8x8xbf16> to vector<8x8xbf16>
    %cst_47 = arith.constant dense<0.000000e+00> : vector<8x256xf32>
    %106 = tpu.matmul %105, %103, %cst_47 {dimension_numbers = #tpu.dot_dimension_numbers<[1], [0], [0], [1], [0, 0, 1, 1], [], []>} : vector<8x8xbf16>, vector<8x256xbf16>, vector<8x256xf32> -> vector<8x256xf32>
    %107 = arith.addf %98, %106 : vector<8x256xf32>
    %cst_48 = arith.constant dense<0.000000e+00> : vector<8xf32>
    %108 = vector.multi_reduction <add>, %107, %cst_48 [1] : vector<8x256xf32> to vector<8xf32>
    %109 = vector.shape_cast %108 : vector<8xf32> to vector<8x1xf32>
    %cst_49 = arith.constant 2.560000e+02 : f32
    %110 = vector.broadcast %cst_49 : f32 to vector<8x1xf32>
    %111 = arith.divf %109, %110 : vector<8x1xf32>
    %112 = vector.broadcast %111 : vector<8x1xf32> to vector<8x256xf32>
    %113 = arith.subf %107, %112 : vector<8x256xf32>
    %114 = arith.mulf %113, %113 : vector<8x256xf32>
    %cst_50 = arith.constant dense<0.000000e+00> : vector<8xf32>
    %115 = vector.multi_reduction <add>, %114, %cst_50 [1] : vector<8x256xf32> to vector<8xf32>
    %116 = vector.shape_cast %115 : vector<8xf32> to vector<8x1xf32>
    %cst_51 = arith.constant 2.560000e+02 : f32
    %117 = vector.broadcast %cst_51 : f32 to vector<8x1xf32>
    %118 = arith.divf %116, %117 : vector<8x1xf32>
    %cst_52 = arith.constant 9.99999974E-6 : f32
    %119 = vector.broadcast %cst_52 : f32 to vector<8x1xf32>
    %120 = arith.addf %118, %119 : vector<8x1xf32>
    %121 = math.rsqrt %120 : vector<8x1xf32>
    %122 = vector.broadcast %121 : vector<8x1xf32> to vector<8x256xf32>
    %123 = arith.mulf %113, %122 : vector<8x256xf32>
    %cst_53 = arith.constant 0.000000e+00 : f32
    %124 = vector.broadcast %cst_53 : f32 to vector<8x256xf32>
    %125 = arith.maximumf %123, %124 : vector<8x256xf32>
    %126 = arith.truncf %125 : vector<8x256xf32> to vector<8x256xbf16>
    %cst_54 = arith.constant 0.000000e+00 : f32
    %127 = vector.broadcast %cst_54 : f32 to vector<8x256xf32>
    %cst_55 = arith.constant 0.000000e+00 : bf16
    %128 = vector.broadcast %cst_55 : bf16 to vector<8x17xbf16>
    %129 = vector.extract_strided_slice %126 {offsets = [0, 0], sizes = [8, 239], strides = [1, 1]} : vector<8x256xbf16> to vector<8x239xbf16>
    %130 = tpu.concatenate %128, %129 in 1 : vector<8x17xbf16>, vector<8x239xbf16> -> vector<8x256xbf16>
    %131 = vector.broadcast %29 : vector<1x256xbf16> to vector<8x256xbf16>
    %132 = arith.mulf %130, %131 : vector<8x256xbf16>
    %c0_56 = arith.constant 0 : index
    %c0_57 = arith.constant 0 : index
    %c0_58 = arith.constant 0 : index
    %133 = vector.load %arg5[%c0_56, %c0_57, %c0_58] : memref<9x8x8xbf16, #tpu.memory_space<vmem>>, vector<1x8x8xbf16>
    %134 = vector.shape_cast %133 : vector<1x8x8xbf16> to vector<8x8xbf16>
    %cst_59 = arith.constant dense<0.000000e+00> : vector<8x256xf32>
    %135 = tpu.matmul %134, %132, %cst_59 {dimension_numbers = #tpu.dot_dimension_numbers<[1], [0], [0], [1], [0, 0, 1, 1], [], []>} : vector<8x8xbf16>, vector<8x256xbf16>, vector<8x256xf32> -> vector<8x256xf32>
    %136 = arith.addf %127, %135 : vector<8x256xf32>
    %cst_60 = arith.constant 0.000000e+00 : bf16
    %137 = vector.broadcast %cst_60 : bf16 to vector<8x16xbf16>
    %138 = vector.extract_strided_slice %126 {offsets = [0, 0], sizes = [8, 240], strides = [1, 1]} : vector<8x256xbf16> to vector<8x240xbf16>
    %139 = tpu.concatenate %137, %138 in 1 : vector<8x16xbf16>, vector<8x240xbf16> -> vector<8x256xbf16>
    %c1_61 = arith.constant 1 : index
    %c0_62 = arith.constant 0 : index
    %c0_63 = arith.constant 0 : index
    %140 = vector.load %arg5[%c1_61, %c0_62, %c0_63] : memref<9x8x8xbf16, #tpu.memory_space<vmem>>, vector<1x8x8xbf16>
    %141 = vector.shape_cast %140 : vector<1x8x8xbf16> to vector<8x8xbf16>
    %cst_64 = arith.constant dense<0.000000e+00> : vector<8x256xf32>
    %142 = tpu.matmul %141, %139, %cst_64 {dimension_numbers = #tpu.dot_dimension_numbers<[1], [0], [0], [1], [0, 0, 1, 1], [], []>} : vector<8x8xbf16>, vector<8x256xbf16>, vector<8x256xf32> -> vector<8x256xf32>
    %143 = arith.addf %136, %142 : vector<8x256xf32>
    %cst_65 = arith.constant 0.000000e+00 : bf16
    %144 = vector.broadcast %cst_65 : bf16 to vector<8x15xbf16>
    %145 = vector.extract_strided_slice %126 {offsets = [0, 0], sizes = [8, 241], strides = [1, 1]} : vector<8x256xbf16> to vector<8x241xbf16>
    %146 = tpu.concatenate %144, %145 in 1 : vector<8x15xbf16>, vector<8x241xbf16> -> vector<8x256xbf16>
    %147 = vector.broadcast %34 : vector<1x256xbf16> to vector<8x256xbf16>
    %148 = arith.mulf %146, %147 : vector<8x256xbf16>
    %c2_66 = arith.constant 2 : index
    %c0_67 = arith.constant 0 : index
    %c0_68 = arith.constant 0 : index
    %149 = vector.load %arg5[%c2_66, %c0_67, %c0_68] : memref<9x8x8xbf16, #tpu.memory_space<vmem>>, vector<1x8x8xbf16>
    %150 = vector.shape_cast %149 : vector<1x8x8xbf16> to vector<8x8xbf16>
    %cst_69 = arith.constant dense<0.000000e+00> : vector<8x256xf32>
    %151 = tpu.matmul %150, %148, %cst_69 {dimension_numbers = #tpu.dot_dimension_numbers<[1], [0], [0], [1], [0, 0, 1, 1], [], []>} : vector<8x8xbf16>, vector<8x256xbf16>, vector<8x256xf32> -> vector<8x256xf32>
    %152 = arith.addf %143, %151 : vector<8x256xf32>
    %cst_70 = arith.constant 0.000000e+00 : bf16
    %153 = vector.broadcast %cst_70 : bf16 to vector<8x1xbf16>
    %154 = vector.extract_strided_slice %126 {offsets = [0, 0], sizes = [8, 255], strides = [1, 1]} : vector<8x256xbf16> to vector<8x255xbf16>
    %155 = tpu.concatenate %153, %154 in 1 : vector<8x1xbf16>, vector<8x255xbf16> -> vector<8x256xbf16>
    %156 = vector.broadcast %29 : vector<1x256xbf16> to vector<8x256xbf16>
    %157 = arith.mulf %155, %156 : vector<8x256xbf16>
    %c3_71 = arith.constant 3 : index
    %c0_72 = arith.constant 0 : index
    %c0_73 = arith.constant 0 : index
    %158 = vector.load %arg5[%c3_71, %c0_72, %c0_73] : memref<9x8x8xbf16, #tpu.memory_space<vmem>>, vector<1x8x8xbf16>
    %159 = vector.shape_cast %158 : vector<1x8x8xbf16> to vector<8x8xbf16>
    %cst_74 = arith.constant dense<0.000000e+00> : vector<8x256xf32>
    %160 = tpu.matmul %159, %157, %cst_74 {dimension_numbers = #tpu.dot_dimension_numbers<[1], [0], [0], [1], [0, 0, 1, 1], [], []>} : vector<8x8xbf16>, vector<8x256xbf16>, vector<8x256xf32> -> vector<8x256xf32>
    %161 = arith.addf %152, %160 : vector<8x256xf32>
    %c4_75 = arith.constant 4 : index
    %c0_76 = arith.constant 0 : index
    %c0_77 = arith.constant 0 : index
    %162 = vector.load %arg5[%c4_75, %c0_76, %c0_77] : memref<9x8x8xbf16, #tpu.memory_space<vmem>>, vector<1x8x8xbf16>
    %163 = vector.shape_cast %162 : vector<1x8x8xbf16> to vector<8x8xbf16>
    %cst_78 = arith.constant dense<0.000000e+00> : vector<8x256xf32>
    %164 = tpu.matmul %163, %126, %cst_78 {dimension_numbers = #tpu.dot_dimension_numbers<[1], [0], [0], [1], [0, 0, 1, 1], [], []>} : vector<8x8xbf16>, vector<8x256xbf16>, vector<8x256xf32> -> vector<8x256xf32>
    %165 = arith.addf %161, %164 : vector<8x256xf32>
    %cst_79 = arith.constant 0.000000e+00 : bf16
    %166 = vector.broadcast %cst_79 : bf16 to vector<8x1xbf16>
    %167 = vector.extract_strided_slice %126 {offsets = [0, 1], sizes = [8, 255], strides = [1, 1]} : vector<8x256xbf16> to vector<8x255xbf16>
    %168 = tpu.concatenate %167, %166 in 1 : vector<8x255xbf16>, vector<8x1xbf16> -> vector<8x256xbf16>
    %169 = vector.broadcast %34 : vector<1x256xbf16> to vector<8x256xbf16>
    %170 = arith.mulf %168, %169 : vector<8x256xbf16>
    %c5_80 = arith.constant 5 : index
    %c0_81 = arith.constant 0 : index
    %c0_82 = arith.constant 0 : index
    %171 = vector.load %arg5[%c5_80, %c0_81, %c0_82] : memref<9x8x8xbf16, #tpu.memory_space<vmem>>, vector<1x8x8xbf16>
    %172 = vector.shape_cast %171 : vector<1x8x8xbf16> to vector<8x8xbf16>
    %cst_83 = arith.constant dense<0.000000e+00> : vector<8x256xf32>
    %173 = tpu.matmul %172, %170, %cst_83 {dimension_numbers = #tpu.dot_dimension_numbers<[1], [0], [0], [1], [0, 0, 1, 1], [], []>} : vector<8x8xbf16>, vector<8x256xbf16>, vector<8x256xf32> -> vector<8x256xf32>
    %174 = arith.addf %165, %173 : vector<8x256xf32>
    %cst_84 = arith.constant 0.000000e+00 : bf16
    %175 = vector.broadcast %cst_84 : bf16 to vector<8x15xbf16>
    %176 = vector.extract_strided_slice %126 {offsets = [0, 15], sizes = [8, 241], strides = [1, 1]} : vector<8x256xbf16> to vector<8x241xbf16>
    %177 = tpu.concatenate %176, %175 in 1 : vector<8x241xbf16>, vector<8x15xbf16> -> vector<8x256xbf16>
    %178 = vector.broadcast %29 : vector<1x256xbf16> to vector<8x256xbf16>
    %179 = arith.mulf %177, %178 : vector<8x256xbf16>
    %c6_85 = arith.constant 6 : index
    %c0_86 = arith.constant 0 : index
    %c0_87 = arith.constant 0 : index
    %180 = vector.load %arg5[%c6_85, %c0_86, %c0_87] : memref<9x8x8xbf16, #tpu.memory_space<vmem>>, vector<1x8x8xbf16>
    %181 = vector.shape_cast %180 : vector<1x8x8xbf16> to vector<8x8xbf16>
    %cst_88 = arith.constant dense<0.000000e+00> : vector<8x256xf32>
    %182 = tpu.matmul %181, %179, %cst_88 {dimension_numbers = #tpu.dot_dimension_numbers<[1], [0], [0], [1], [0, 0, 1, 1], [], []>} : vector<8x8xbf16>, vector<8x256xbf16>, vector<8x256xf32> -> vector<8x256xf32>
    %183 = arith.addf %174, %182 : vector<8x256xf32>
    %cst_89 = arith.constant 0.000000e+00 : bf16
    %184 = vector.broadcast %cst_89 : bf16 to vector<8x16xbf16>
    %185 = vector.extract_strided_slice %126 {offsets = [0, 16], sizes = [8, 240], strides = [1, 1]} : vector<8x256xbf16> to vector<8x240xbf16>
    %186 = tpu.concatenate %185, %184 in 1 : vector<8x240xbf16>, vector<8x16xbf16> -> vector<8x256xbf16>
    %c7_90 = arith.constant 7 : index
    %c0_91 = arith.constant 0 : index
    %c0_92 = arith.constant 0 : index
    %187 = vector.load %arg5[%c7_90, %c0_91, %c0_92] : memref<9x8x8xbf16, #tpu.memory_space<vmem>>, vector<1x8x8xbf16>
    %188 = vector.shape_cast %187 : vector<1x8x8xbf16> to vector<8x8xbf16>
    %cst_93 = arith.constant dense<0.000000e+00> : vector<8x256xf32>
    %189 = tpu.matmul %188, %186, %cst_93 {dimension_numbers = #tpu.dot_dimension_numbers<[1], [0], [0], [1], [0, 0, 1, 1], [], []>} : vector<8x8xbf16>, vector<8x256xbf16>, vector<8x256xf32> -> vector<8x256xf32>
    %190 = arith.addf %183, %189 : vector<8x256xf32>
    %cst_94 = arith.constant 0.000000e+00 : bf16
    %191 = vector.broadcast %cst_94 : bf16 to vector<8x17xbf16>
    %192 = vector.extract_strided_slice %126 {offsets = [0, 17], sizes = [8, 239], strides = [1, 1]} : vector<8x256xbf16> to vector<8x239xbf16>
    %193 = tpu.concatenate %192, %191 in 1 : vector<8x239xbf16>, vector<8x17xbf16> -> vector<8x256xbf16>
    %194 = vector.broadcast %34 : vector<1x256xbf16> to vector<8x256xbf16>
    %195 = arith.mulf %193, %194 : vector<8x256xbf16>
    %c8_95 = arith.constant 8 : index
    %c0_96 = arith.constant 0 : index
    %c0_97 = arith.constant 0 : index
    %196 = vector.load %arg5[%c8_95, %c0_96, %c0_97] : memref<9x8x8xbf16, #tpu.memory_space<vmem>>, vector<1x8x8xbf16>
    %197 = vector.shape_cast %196 : vector<1x8x8xbf16> to vector<8x8xbf16>
    %cst_98 = arith.constant dense<0.000000e+00> : vector<8x256xf32>
    %198 = tpu.matmul %197, %195, %cst_98 {dimension_numbers = #tpu.dot_dimension_numbers<[1], [0], [0], [1], [0, 0, 1, 1], [], []>} : vector<8x8xbf16>, vector<8x256xbf16>, vector<8x256xf32> -> vector<8x256xf32>
    %199 = arith.addf %190, %198 : vector<8x256xf32>
    %cst_99 = arith.constant dense<0.000000e+00> : vector<8xf32>
    %200 = vector.multi_reduction <add>, %199, %cst_99 [1] : vector<8x256xf32> to vector<8xf32>
    %201 = vector.shape_cast %200 : vector<8xf32> to vector<8x1xf32>
    %cst_100 = arith.constant 2.560000e+02 : f32
    %202 = vector.broadcast %cst_100 : f32 to vector<8x1xf32>
    %203 = arith.divf %201, %202 : vector<8x1xf32>
    %204 = vector.broadcast %203 : vector<8x1xf32> to vector<8x256xf32>
    %205 = arith.subf %199, %204 : vector<8x256xf32>
    %206 = arith.mulf %205, %205 : vector<8x256xf32>
    %cst_101 = arith.constant dense<0.000000e+00> : vector<8xf32>
    %207 = vector.multi_reduction <add>, %206, %cst_101 [1] : vector<8x256xf32> to vector<8xf32>
    %208 = vector.shape_cast %207 : vector<8xf32> to vector<8x1xf32>
    %cst_102 = arith.constant 2.560000e+02 : f32
    %209 = vector.broadcast %cst_102 : f32 to vector<8x1xf32>
    %210 = arith.divf %208, %209 : vector<8x1xf32>
    %cst_103 = arith.constant 9.99999974E-6 : f32
    %211 = vector.broadcast %cst_103 : f32 to vector<8x1xf32>
    %212 = arith.addf %210, %211 : vector<8x1xf32>
    %213 = math.rsqrt %212 : vector<8x1xf32>
    %214 = vector.broadcast %213 : vector<8x1xf32> to vector<8x256xf32>
    %215 = arith.mulf %205, %214 : vector<8x256xf32>
    %cst_104 = arith.constant 0.000000e+00 : f32
    %216 = vector.broadcast %cst_104 : f32 to vector<8x256xf32>
    %217 = arith.maximumf %215, %216 : vector<8x256xf32>
    %c0_105 = arith.constant 0 : index
    %c0_106 = arith.constant 0 : index
    %c0_107 = arith.constant 0 : index
    %218 = vector.load %arg6[%c0_105, %c0_106, %c0_107] : memref<1x8x256xf32, #tpu.memory_space<vmem>>, vector<1x8x256xf32>
    %219 = vector.shape_cast %218 : vector<1x8x256xf32> to vector<8x256xf32>
    %220 = vector.shape_cast %217 : vector<8x256xf32> to vector<1x8x256xf32>
    tpu.vector_store %arg6[%c0_105, %c0_106, %c0_107], %220 {strides = array<i32>} : memref<1x8x256xf32, #tpu.memory_space<vmem>>, vector<1x8x256xf32>,
    return
  }
  func.func @transform_0(%arg0: i32) -> (i32, i32, i32) {
    %c0_i32 = arith.constant 0 : i32
    %c0_i32_0 = arith.constant 0 : i32
    %c0_i32_1 = arith.constant 0 : i32
    return %arg0, %c0_i32, %c0_i32_0 : i32, i32, i32
  }
  func.func @transform_1(%arg0: i32) -> (i32, i32, i32) {
    %c0_i32 = arith.constant 0 : i32
    %c0_i32_0 = arith.constant 0 : i32
    %c0_i32_1 = arith.constant 0 : i32
    return %arg0, %c0_i32, %c0_i32_0 : i32, i32, i32
  }
  func.func @transform_2(%arg0: i32) -> (i32, i32) {
    %c0_i32 = arith.constant 0 : i32
    %c0_i32_0 = arith.constant 0 : i32
    %c0_i32_1 = arith.constant 0 : i32
    return %c0_i32, %c0_i32_0 : i32, i32
  }
  func.func @transform_3(%arg0: i32) -> (i32, i32, i32) {
    %c0_i32 = arith.constant 0 : i32
    %c0_i32_0 = arith.constant 0 : i32
    %c0_i32_1 = arith.constant 0 : i32
    %c0_i32_2 = arith.constant 0 : i32
    return %c0_i32, %c0_i32_0, %c0_i32_1 : i32, i32, i32
  }
  func.func @transform_4(%arg0: i32) -> (i32, i32, i32) {
    %c0_i32 = arith.constant 0 : i32
    %c0_i32_0 = arith.constant 0 : i32
    %c0_i32_1 = arith.constant 0 : i32
    %c0_i32_2 = arith.constant 0 : i32
    return %c0_i32, %c0_i32_0, %c0_i32_1 : i32, i32, i32
  }
  func.func @transform_5(%arg0: i32) -> (i32, i32, i32) {
    %c0_i32 = arith.constant 0 : i32
    %c0_i32_0 = arith.constant 0 : i32
    %c0_i32_1 = arith.constant 0 : i32
    return %arg0, %c0_i32, %c0_i32_0 : i32, i32, i32
  }
}

</mosaic_0001>

<llo_original>
// kernel: upsampling_concat.1
$region0: #{upsampling_concat.1}
  #allocation0 [shape = 'u32[]', space=smem, size = 0x4, offset = 0x4, fixed_abs, tag = 'smem constant byte address 0x4 - core index']
  #allocation1 [shape = 'u32[72,128]{1,0:T(1,128)}', space=vmem, size = 0x9000, scoped, tag = 'internal scratch']
  %s0 = inlined_call_operand.vmem [shape: bf16[2,4,256], index: 0, kind: input, shape index: {}]
  %s1 = inlined_call_operand.vmem [shape: bf16[2,4,64], index: 1, kind: input, shape index: {}]
  %s2 = inlined_call_operand.vmem [shape: bf16[64,256], index: 2, kind: input, shape index: {}]
  %s3 = inlined_call_operand.vmem [shape: bf16[9,8,8], index: 3, kind: input, shape index: {}]
  %s4 = inlined_call_operand.vmem [shape: bf16[9,8,8], index: 4, kind: input, shape index: {}]
  %s5 = inlined_call_operand.vmem [shape: f32[2,8,256], index: 5, kind: output, shape index: {}]
  %s6 = sld [smem:[#allocation0]]
  $region53: #{upsampling_concat.1} parent=0
    _
  %s8 = ssub.s32 1, %s6
  %s9 = scalar_select 0, %s8, %s6
  loop: start=0, step=1, limit=4
  $region2: #{upsampling_concat.1} parent=0 // loop_pre_header
    _
  $region3: #{upsampling_concat.1} parent=0 // loop_header
    %s11 = sphi 0, %s15
    %p12 = scmp.ge.s32.totalorder %s11, 4
    %s21 = sphi 0, %s23
    %s24 = sphi 0, %s21
    %s25 = sphi 0, %s24
    %s41 = sphi 0, %s25
    %s47 = sphi 0, %s49
    %s50 = sphi 0, %s47
    %s51 = sphi 0, %s50
    %s67 = sphi 0, %s51
    %s71 = sphi 0, %s71
    %s73 = sphi 0, %s71
    %s74 = sphi 0, %s73
    %s88 = sphi 0, %s74
    %s92 = sphi 0, %s92
    %s94 = sphi 0, %s92
    %s95 = sphi 0, %s94
    %s109 = sphi 0, %s95
    %s113 = sphi 0, %s113
    %s115 = sphi 0, %s113
    %s116 = sphi 0, %s115
    %s130 = sphi 0, %s116
    %s136 = sphi 0, %s138
    %s139 = sphi 0, %s136
    %s140 = sphi 0, %s139
    %s156 = sphi 0, %s140
  $region4: #{upsampling_concat.1} parent=0 // loop_header_branch
    %14 = sbr.rel (%p12) target = $region8
  $region5: #{upsampling_concat.1} parent=0 // loop_body
    %s16 = ssub.s32 %s11, 1
    %s17 = ssub.s32 %s11, 2
    %s18 = sadd.s32 %s11, 1
    %s19 = ssub.s32 %s11, %s18
    %p20 = scmp.eq.s32.totalorder %s19, 0
    %s22 = sadd.s32 %s21, 1
    %s23 = scalar_select %p20, %s21, %s22
    %p26 = pneg %p20
    %p27 = scmp.eq.s32.totalorder %s11, 1
    %p28 = por %p26, %p27
    %p29 = scmp.ne.s32.totalorder %s21, %s24
    %p30 = scmp.eq.s32.totalorder %s11, 0
    %p31 = por %p29, %p30
    %p32 = scmp.ne.s32.totalorder %s21, %s24
    %p33 = scmp.eq.s32.totalorder %s16, 1
    %p34 = por %p32, %p33
    %p35 = scmp.ne.s32.totalorder %s24, %s25
    %p36 = scmp.eq.s32.totalorder %s16, 0
    %p37 = por %p35, %p36
    %p38 = scmp.ne.s32.totalorder %s24, %s25
    %p39 = scmp.eq.s32.totalorder %s17, 1
    %p40 = por %p38, %p39
    %p42 = scmp.ne.s32.totalorder %s25, %s41
    %p43 = scmp.eq.s32.totalorder %s17, 0
    %p44 = por %p42, %p43
    %s45 = ssub.s32 %s11, %s18
    %p46 = scmp.eq.s32.totalorder %s45, 0
    %s48 = sadd.s32 %s47, 1
    %s49 = scalar_select %p46, %s47, %s48
    %p52 = pneg %p46
    %p53 = scmp.eq.s32.totalorder %s11, 1
    %p54 = por %p52, %p53
    %p55 = scmp.ne.s32.totalorder %s47, %s50
    %p56 = scmp.eq.s32.totalorder %s11, 0
    %p57 = por %p55, %p56
    %p58 = scmp.ne.s32.totalorder %s47, %s50
    %p59 = scmp.eq.s32.totalorder %s16, 1
    %p60 = por %p58, %p59
    %p61 = scmp.ne.s32.totalorder %s50, %s51
    %p62 = scmp.eq.s32.totalorder %s16, 0
    %p63 = por %p61, %p62
    %p64 = scmp.ne.s32.totalorder %s50, %s51
    %p65 = scmp.eq.s32.totalorder %s17, 1
    %p66 = por %p64, %p65
    %p68 = scmp.ne.s32.totalorder %s51, %s67
    %p69 = scmp.eq.s32.totalorder %s17, 0
    %p70 = por %p68, %p69
    %s72 = sadd.s32 %s71, 1
    %p75 = scmp.eq.s32.totalorder %s11, 1
    %p76 = scmp.ne.s32.totalorder %s71, %s73
    %p77 = scmp.eq.s32.totalorder %s11, 0
    %p78 = por %p76, %p77
    %p79 = scmp.ne.s32.totalorder %s71, %s73
    %p80 = scmp.eq.s32.totalorder %s16, 1
    %p81 = por %p79, %p80
    %p82 = scmp.ne.s32.totalorder %s73, %s74
    %p83 = scmp.eq.s32.totalorder %s16, 0
    %p84 = por %p82, %p83
    %p85 = scmp.ne.s32.totalorder %s73, %s74
    %p86 = scmp.eq.s32.totalorder %s17, 1
    %p87 = por %p85, %p86
    %p89 = scmp.ne.s32.totalorder %s74, %s88
    %p90 = scmp.eq.s32.totalorder %s17, 0
    %p91 = por %p89, %p90
    %s93 = sadd.s32 %s92, 1
    %p96 = scmp.eq.s32.totalorder %s11, 1
    %p97 = scmp.ne.s32.totalorder %s92, %s94
    %p98 = scmp.eq.s32.totalorder %s11, 0
    %p99 = por %p97, %p98
    %p100 = scmp.ne.s32.totalorder %s92, %s94
    %p101 = scmp.eq.s32.totalorder %s16, 1
    %p102 = por %p100, %p101
    %p103 = scmp.ne.s32.totalorder %s94, %s95
    %p104 = scmp.eq.s32.totalorder %s16, 0
    %p105 = por %p103, %p104
    %p106 = scmp.ne.s32.totalorder %s94, %s95
    %p107 = scmp.eq.s32.totalorder %s17, 1
    %p108 = por %p106, %p107
    %p110 = scmp.ne.s32.totalorder %s95, %s109
    %p111 = scmp.eq.s32.totalorder %s17, 0
    %p112 = por %p110, %p111
    %s114 = sadd.s32 %s113, 1
    %p117 = scmp.eq.s32.totalorder %s11, 1
    %p118 = scmp.ne.s32.totalorder %s113, %s115
    %p119 = scmp.eq.s32.totalorder %s11, 0
    %p120 = por %p118, %p119
    %p121 = scmp.ne.s32.totalorder %s113, %s115
    %p122 = scmp.eq.s32.totalorder %s16, 1
    %p123 = por %p121, %p122
    %p124 = scmp.ne.s32.totalorder %s115, %s116
    %p125 = scmp.eq.s32.totalorder %s16, 0
    %p126 = por %p124, %p125
    %p127 = scmp.ne.s32.totalorder %s115, %s116
    %p128 = scmp.eq.s32.totalorder %s17, 1
    %p129 = por %p127, %p128
    %p131 = scmp.ne.s32.totalorder %s116, %s130
    %p132 = scmp.eq.s32.totalorder %s17, 0
    %p133 = por %p131, %p132
    %s134 = ssub.s32 %s11, %s18
    %p135 = scmp.eq.s32.totalorder %s134, 0
    %s137 = sadd.s32 %s136, 1
    %s138 = scalar_select %p135, %s136, %s137
    %p141 = pneg %p135
    %p142 = scmp.eq.s32.totalorder %s11, 1
    %p143 = por %p141, %p142
    %p144 = scmp.ne.s32.totalorder %s136, %s139
    %p145 = scmp.eq.s32.totalorder %s11, 0
    %p146 = por %p144, %p145
    %p147 = scmp.ne.s32.totalorder %s136, %s139
    %p148 = scmp.eq.s32.totalorder %s16, 1
    %p149 = por %p147, %p148
    %p150 = scmp.ne.s32.totalorder %s139, %s140
    %p151 = scmp.eq.s32.totalorder %s16, 0
    %p152 = por %p150, %p151
    %p153 = scmp.ne.s32.totalorder %s139, %s140
    %p154 = scmp.eq.s32.totalorder %s17, 1
    %p155 = por %p153, %p154
    %p157 = scmp.ne.s32.totalorder %s140, %s156
    %p158 = scmp.eq.s32.totalorder %s17, 0
    %p159 = por %p157, %p158
    %p160 = scmp.le.s32.totalorder 1, %s11
    %p161 = scmp.lt.s32.totalorder %s11, 3
    %p162 = pnand %p160, %p161
    %p163 = pneg %p162
    // Predicated region
    $region9: #{upsampling_concat.1} parent=5 // pred_check
      _
    $region10: #{upsampling_concat.1} parent=5 // pred_check_branch
      %165 = sbr.rel (%p162) target = $region12
    $region11: #{upsampling_concat.1} parent=5 // pred_region
      %s166 = ssub.s32 %s11, 1
      // Predicated region
      $region13: #{upsampling_concat.1} parent=11 // pred_check
        %p167 = pneg %p84
      $region14: #{upsampling_concat.1} parent=11 // pred_check_branch
        %169 = sbr.rel (%p167) target = $region16
      $region15: #{upsampling_concat.1} parent=11 // pred_region
        _
      $region16: #{upsampling_concat.1} parent=11 // pred_fallthru
        _
      // Predicated region
      $region17: #{upsampling_concat.1} parent=11 // pred_check
        %p170 = pneg %p105
      $region18: #{upsampling_concat.1} parent=11 // pred_check_branch
        %172 = sbr.rel (%p170) target = $region20
      $region19: #{upsampling_concat.1} parent=11 // pred_region
        _
      $region20: #{upsampling_concat.1} parent=11 // pred_fallthru
        _
      // Predicated region
      $region21: #{upsampling_concat.1} parent=11 // pred_check
        %p173 = pneg %p126
      $region22: #{upsampling_concat.1} parent=11 // pred_check_branch
        %175 = sbr.rel (%p173) target = $region24
      $region23: #{upsampling_concat.1} parent=11 // pred_region
        _
      $region24: #{upsampling_concat.1} parent=11 // pred_fallthru
        _
    $region12: #{upsampling_concat.1} parent=5 // pred_fallthru
      _
    %p176 = scmp.lt.s32.totalorder %s11, 2
    // Predicated region
    $region25: #{upsampling_concat.1} parent=5 // pred_check
      %p177 = pneg %p176
    $region26: #{upsampling_concat.1} parent=5 // pred_check_branch
      %179 = sbr.rel (%p177) target = $region28
    $region27: #{upsampling_concat.1} parent=5 // pred_region
      // Predicated region
      $region29: #{upsampling_concat.1} parent=27 // pred_check
        %p180 = pneg %p31
      $region30: #{upsampling_concat.1} parent=27 // pred_check_branch
        %182 = sbr.rel (%p180) target = $region32
      $region31: #{upsampling_concat.1} parent=27 // pred_region
        %p183 = scmp.lt.s32.totalorder %s11, 1
        %s184 = scalar_select %p183, %s11, 1
        %s185 = smul.addr %s184, 2
        %s186 = smul.addr %s185, 2
        %s187 = scalar_lea.vmem %s0, %s186
      $region32: #{upsampling_concat.1} parent=27 // pred_fallthru
        _
      // Predicated region
      $region33: #{upsampling_concat.1} parent=27 // pred_check
        %p188 = pneg %p57
      $region34: #{upsampling_concat.1} parent=27 // pred_check_branch
        %190 = sbr.rel (%p188) target = $region36
      $region35: #{upsampling_concat.1} parent=27 // pred_region
        %p191 = scmp.lt.s32.totalorder %s11, 1
        %s192 = scalar_select %p191, %s11, 1
        %s193 = smul.addr %s192, 2
        %s194 = scalar_lea.vmem %s1, %s193
      $region36: #{upsampling_concat.1} parent=27 // pred_fallthru
        _
    $region28: #{upsampling_concat.1} parent=5 // pred_fallthru
      _
    %p195 = scmp.le.s32.totalorder 1, %s11
    %p196 = scmp.lt.s32.totalorder %s11, 3
    %p197 = pnand %p195, %p196
    %p198 = pneg %p197
    // Predicated region
    $region37: #{upsampling_concat.1} parent=5 // pred_check
      _
    $region38: #{upsampling_concat.1} parent=5 // pred_check_branch
      %200 = sbr.rel (%p197) target = $region40
    $region39: #{upsampling_concat.1} parent=5 // pred_region
      %s201 = ssub.s32 %s11, 1
      %p202 = scmp.lt.s32.totalorder %s16, 1
      %s203 = scalar_select %p202, %s16, 1
      %s204 = smul.addr %s203, 2
      %s205 = smul.addr %s204, 2
      %s206 = scalar_lea.vmem %s0, %s205
      %p207 = pneg %p37
      %p208 = pneg %p34
      %p209 = scmp.lt.s32.totalorder %s16, 1
      %s210 = scalar_select %p209, %s16, 1
      %s211 = smul.addr %s210, 2
      %s212 = scalar_lea.vmem %s1, %s211
      %p213 = pneg %p63
      %p214 = pneg %p60
      %p215 = pneg %p84
      %p216 = pneg %p81
      %p217 = pneg %p105
      %p218 = pneg %p102
      %p219 = pneg %p126
      %p220 = pneg %p123
      %p221 = pneg %p152
      %p222 = pneg %p149
      %p223 = scmp.lt.s32.totalorder %s16, 1
      %s224 = scalar_select %p223, %s16, 1
      %s225 = smul.addr %s224, 2
      %s226 = smul.addr %s225, 8
      %s227 = scalar_lea.vmem %s5, %s226
      %p228 = scmp.lt.s32.totalorder %s16, 1
      %s229 = scalar_select %p228, %s16, 1
      %s230 = smul.addr %s229, 2
      %s231 = smul.addr %s230, 2
      %s232 = scalar_lea.vmem %s0, %s231
      %p233 = scmp.lt.s32.totalorder %s16, 1
      %s234 = scalar_select %p233, %s16, 1
      %s235 = smul.addr %s234, 2
      %s236 = scalar_lea.vmem %s1, %s235
      %p237 = scmp.lt.s32.totalorder %s16, 1
      %s238 = scalar_select %p237, %s16, 1
      %s239 = smul.addr %s238, 2
      %s240 = smul.addr %s239, 8
      %s241 = scalar_lea.vmem %s5, %s240
      %v243 = vld [vmem:[%s236] sm:$0x3]
      %v244 = vld [vmem:[%s2] sm:$0xff]
      %v245 = vld [vmem:[%s2 + $0x8] sm:$0xff]
      %v246 = vld [vmem:[%s2 + $0x10] sm:$0xff]
      %v247 = vld [vmem:[%s2 + $0x18] sm:$0xff]
      %v248 = vld [vmem:[%s2 + $0x20] sm:$0xff]
      %v249 = vld [vmem:[%s2 + $0x28] sm:$0xff]
      %v250 = vld [vmem:[%s2 + $0x30] sm:$0xff]
      %v251 = vld [vmem:[%s2 + $0x38] sm:$0xff]
      %v260 = vunpack.c.l.b16 %v244
      %v261 = vunpack.c.h.b16 %v244
      %v262 = vunpack.c.l.b16 %v245
      %v263 = vunpack.c.h.b16 %v245
      %v264 = vunpack.c.l.b16 %v246
      %v265 = vunpack.c.h.b16 %v246
      %v266 = vunpack.c.l.b16 %v247
      %v267 = vunpack.c.h.b16 %v247
      %v268 = vunpack.c.l.b16 %v248
      %v269 = vunpack.c.h.b16 %v248
      %v270 = vunpack.c.l.b16 %v249
      %v271 = vunpack.c.h.b16 %v249
      %v272 = vunpack.c.l.b16 %v250
      %v273 = vunpack.c.h.b16 %v250
      %v274 = vunpack.c.l.b16 %v251
      %v275 = vunpack.c.h.b16 %v251
      %v276 = vpack.c.b16 %v262, %v260
      %v277 = vpack.c.b16 %v263, %v261
      %v278 = vpack.c.b16 %v266, %v264
      %v279 = vpack.c.b16 %v267, %v265
      %v280 = vpack.c.b16 %v270, %v268
      %v281 = vpack.c.b16 %v271, %v269
      %v282 = vpack.c.b16 %v274, %v272
      %v283 = vpack.c.b16 %v275, %v273
      %vm292 = vcmask 523264
      %v294 = vsel %vm292, %v243, 0
      %296 = vmatpush.bf16.msra.mxu0 0
      %297 = vmatpush.bf16.msra.mxu0 0
      %298 = vmatpush.bf16.msra.mxu0 0
      %299 = vmatpush.bf16.msra.mxu0 0
      %300 = vmatpush.bf16.msra.mxu0 %v282
      %301 = vmatpush.bf16.msra.mxu0 %v280
      %302 = vmatpush.bf16.msra.mxu0 %v278
      %303 = vmatpush.bf16.msra.mxu0 %v276
      %304 = vmatmul.bf16.gmra.mxu0 %v294
      %v305 = vpop.f32.mrf.mxu0
      %v306 = vadd.f32 0.0, %v305
      %v307 = vpop.f32.mrf.mxu0
      %308 = vdwg.mxu0
      %309 = vmatpush.bf16.msra.mxu0 0
      %310 = vmatpush.bf16.msra.mxu0 0
      %311 = vmatpush.bf16.msra.mxu0 0
      %312 = vmatpush.bf16.msra.mxu0 0
      %313 = vmatpush.bf16.msra.mxu0 %v283
      %314 = vmatpush.bf16.msra.mxu0 %v281
      %315 = vmatpush.bf16.msra.mxu0 %v279
      %316 = vmatpush.bf16.msra.mxu0 %v277
      %317 = vmatmul.bf16.gmra.mxu0 %v294
      %v318 = vpop.f32.mrf.mxu0
      %v319 = vadd.f32 0.0, %v318
      %v320 = vpop.f32.mrf.mxu0
      %321 = vdwg.mxu0
      %v322 = vpack.c.bf16 %v319, %v306
      %v323 = vld [vmem:[%s232] sm:$0xf]
      %325 = vst [vmem:[#allocation1] ss:$4 sm:$0xff] %v323
      %v326 = vld.sshfl [vmem:[#allocation1] sm:$0xff pattern:$0x73625140]
      %v327 = vld.sshfl [vmem:[#allocation1 + $0x8] sm:$0xff pattern:$0x73625140]
      %v329 = vunpack.c.l.b16 %v322
      %v330 = vunpack.c.h.b16 %v322
      %v331 = vpack.c.b16 %v329, %v329
      %v332 = vpack.c.b16 %v330, %v330
      %v333 = vrot.slane %v331, 6
      %v334 = vrot.slane %v332, 6
      %vm335 = vcmask 1041408
      %v337 = vsel %vm335, %v326, %v333
      %v339 = vsel %vm335, %v327, %v334
      %v340 = vlaneseq
      %v341 = vand.u32 %v340, 127
      %v342 = vadd.s32 %v341, 128
      %vm343 = vcmp.lt.s32.totalorder %v341, 0
      %v344 = vsub.s32 0, %v341
      %v345 = vsel %vm343, %v344, %v341
      %v346 = vshrl.u32 %v345, 4
      %v347 = vand.u32 %v345, 15
      %v348 = vsub.s32 0, %v347
      %v349 = vsel %vm343, %v348, %v347
      %vm350 = vcmp.lt.s32.totalorder %v342, 0
      %v351 = vsub.s32 0, %v342
      %v352 = vsel %vm350, %v351, %v342
      %v353 = vshrl.u32 %v352, 4
      %v354 = vand.u32 %v352, 15
      %v355 = vsub.s32 0, %v354
      %v356 = vsel %vm350, %v355, %v354
      %vm357 = vcmp.ne.s32.totalorder %v349, 0
      %vm358 = vcmp.ne.s32.totalorder %v356, 0
      %vm359 = vcmp.lt.s32.totalorder %v349, 0
      %vm360 = vcmp.lt.s32.totalorder %v356, 0
      %vm361 = vmand %vm359, %vm357
      %vm362 = vmand %vm360, %vm358
      %v363 = vadd.s32 %v349, 16
      %v364 = vadd.s32 %v356, 16
      %v365 = vsel %vm361, %v363, %v349
      %v366 = vsel %vm362, %v364, %v356
      %vm367 = vcmp.ge.s32.totalorder %v365, 1
      %vm368 = vcmp.ge.s32.totalorder %v366, 1
      %v369 = vsel %vm367, 1, 0
      %v370 = vsel %vm368, 1, 0
      %v371 = vcvt.s32.f32 %v369
      %v372 = vcvt.s32.f32 %v370
      %v373 = vpack.c.bf16 %v372, %v371
      %vm374 = vcmp.le.s32.totalorder %v365, 14
      %vm375 = vcmp.le.s32.totalorder %v366, 14
      %v376 = vsel %vm374, 1, 0
      %v377 = vsel %vm375, 1, 0
      %v378 = vcvt.s32.f32 %v376
      %v379 = vcvt.s32.f32 %v377
      %v380 = vpack.c.bf16 %v379, %v378
      %383 = vrot.lane.b32.xlu0 %v337, 17
      %v384 = vpop.permute.xlu0 %383
      %385 = vrot.lane.b32.xlu0 %v339, 17
      %v386 = vpop.permute.xlu0 %385
      %vm387 = vcmask 138240
      %v388 = vsel %vm387, %v384, %v386
      %vm390 = vcmask 138240
      %v393 = vsel %vm390, 0, %v384
      %v395 = vunpack.c.l.bf16 %v393
      %v396 = vunpack.c.l.bf16 %v388
      %v397 = vunpack.c.l.bf16 %v373
      %v398 = vunpack.c.h.bf16 %v373
      %v399 = vmul.f32 %v395, %v397
      %v400 = vmul.f32 %v396, %v398
      %v401 = vpack.c.bf16 %v399, %v399
      %v402 = vpack.c.bf16 %v400, %v400
      %v403 = vld [vmem:[%s3] sm:$0xf]
      %404 = vrot.lane.b32.xlu0 %v337, 16
      %v405 = vpop.permute.xlu0 %404
      %406 = vrot.lane.b32.xlu0 %v339, 16
      %v407 = vpop.permute.xlu0 %406
      %vm408 = vcmask 130048
      %v409 = vsel %vm408, %v405, %v407
      %vm410 = vcmask 130048
      %v412 = vsel %vm410, 0, %v405
      %s413 = scalar_lea.vmem %s3, 4
      %v414 = vld [vmem:[%s413] sm:$0xf]
      %vm415 = vcmask 64512
      %v417 = vsel %vm415, %v414, 0
      %vm419 = vcmask 1043456
      %v420 = vsel %vm419, %v412, 0
      %v423 = vsel %vm419, %v409, 0
      %425 = vmatpush.bf16.msra.mxu0 0
      %426 = vmatpush.bf16.msra.mxu0 0
      %427 = vmatpush.bf16.msra.mxu0 0
      %428 = vmatpush.bf16.msra.mxu0 0
      %429 = vmatpush.bf16.msra.mxu0 0
      %430 = vmatpush.bf16.msra.mxu0 0
      %431 = vmatpush.bf16.msra.mxu0 0
      %432 = vmatpush.bf16.msra.mxu0 %v420
      %433 = vmatmul.bf16.gmra.mxu0 %v417
      %v434 = vpop.f32.mrf.mxu0
      %v435 = vadd.f32 0.0, %v434
      %v436 = vpop.f32.mrf.mxu0
      %437 = vdwg.mxu0
      %438 = vmatpush.bf16.msra.mxu0 0
      %439 = vmatpush.bf16.msra.mxu0 0
      %440 = vmatpush.bf16.msra.mxu0 0
      %441 = vmatpush.bf16.msra.mxu0 0
      %442 = vmatpush.bf16.msra.mxu0 0
      %443 = vmatpush.bf16.msra.mxu0 0
      %444 = vmatpush.bf16.msra.mxu0 0
      %445 = vmatpush.bf16.msra.mxu0 %v423
      %446 = vmatmul.bf16.gmra.mxu0 %v417
      %v447 = vpop.f32.mrf.mxu0
      %v448 = vadd.f32 0.0, %v447
      %v449 = vpop.f32.mrf.mxu0
      %450 = vdwg.mxu0
      %v452 = vsel %vm415, %v403, 0
      %v455 = vsel %vm419, %v401, 0
      %v458 = vsel %vm419, %v402, 0
      %460 = vmatpush.bf16.msra.mxu0 0
      %461 = vmatpush.bf16.msra.mxu0 0
      %462 = vmatpush.bf16.msra.mxu0 0
      %463 = vmatpush.bf16.msra.mxu0 0
      %464 = vmatpush.bf16.msra.mxu0 0
      %465 = vmatpush.bf16.msra.mxu0 0
      %466 = vmatpush.bf16.msra.mxu0 0
      %467 = vmatpush.bf16.msra.mxu0 %v455
      %468 = vmatmul.bf16.gmra.mxu0 %v452
      %v469 = vpop.f32.mrf.mxu0
      %v470 = vadd.f32 %v435, %v469
      %v471 = vpop.f32.mrf.mxu0
      %472 = vdwg.mxu0
      %473 = vmatpush.bf16.msra.mxu0 0
      %474 = vmatpush.bf16.msra.mxu0 0
      %475 = vmatpush.bf16.msra.mxu0 0
      %476 = vmatpush.bf16.msra.mxu0 0
      %477 = vmatpush.bf16.msra.mxu0 0
      %478 = vmatpush.bf16.msra.mxu0 0
      %479 = vmatpush.bf16.msra.mxu0 0
      %480 = vmatpush.bf16.msra.mxu0 %v458
      %481 = vmatmul.bf16.gmra.mxu0 %v452
      %v482 = vpop.f32.mrf.mxu0
      %v483 = vadd.f32 %v448, %v482
      %v484 = vpop.f32.mrf.mxu0
      %485 = vdwg.mxu0
      %486 = vrot.lane.b32.xlu0 %v337, 15
      %v487 = vpop.permute.xlu0 %486
      %488 = vrot.lane.b32.xlu0 %v339, 15
      %v489 = vpop.permute.xlu0 %488
      %vm490 = vcmask 121856
      %v491 = vsel %vm490, %v487, %v489
      %vm493 = vcmask 121856
      %v495 = vsel %vm493, 0, %v487
      %v497 = vunpack.c.l.bf16 %v495
      %v498 = vunpack.c.l.bf16 %v491
      %v499 = vunpack.c.l.bf16 %v380
      %v500 = vunpack.c.h.bf16 %v380
      %v501 = vmul.f32 %v497, %v499
      %v502 = vmul.f32 %v498, %v500
      %v503 = vpack.c.bf16 %v501, %v501
      %v504 = vpack.c.bf16 %v502, %v502
      %s505 = scalar_lea.vmem %s3, 8
      %v506 = vld [vmem:[%s505] sm:$0xf]
      %v508 = vsel %vm415, %v506, 0
      %v511 = vsel %vm419, %v503, 0
      %v514 = vsel %vm419, %v504, 0
      %516 = vmatpush.bf16.msra.mxu0 0
      %517 = vmatpush.bf16.msra.mxu0 0
      %518 = vmatpush.bf16.msra.mxu0 0
      %519 = vmatpush.bf16.msra.mxu0 0
      %520 = vmatpush.bf16.msra.mxu0 0
      %521 = vmatpush.bf16.msra.mxu0 0
      %522 = vmatpush.bf16.msra.mxu0 0
      %523 = vmatpush.bf16.msra.mxu0 %v511
      %524 = vmatmul.bf16.gmra.mxu0 %v508
      %v525 = vpop.f32.mrf.mxu0
      %v526 = vadd.f32 0.0, %v525
      %v527 = vpop.f32.mrf.mxu0
      %528 = vdwg.mxu0
      %529 = vmatpush.bf16.msra.mxu0 0
      %530 = vmatpush.bf16.msra.mxu0 0
      %531 = vmatpush.bf16.msra.mxu0 0
      %532 = vmatpush.bf16.msra.mxu0 0
      %533 = vmatpush.bf16.msra.mxu0 0
      %534 = vmatpush.bf16.msra.mxu0 0
      %535 = vmatpush.bf16.msra.mxu0 0
      %536 = vmatpush.bf16.msra.mxu0 %v514
      %537 = vmatmul.bf16.gmra.mxu0 %v508
      %v538 = vpop.f32.mrf.mxu0
      %v539 = vadd.f32 0.0, %v538
      %v540 = vpop.f32.mrf.mxu0
      %541 = vdwg.mxu0
      %v542 = vadd.f32 %v470, %v526
      %v543 = vadd.f32 %v483, %v539
      %544 = vrot.lane.b32.xlu0 %v337, 1
      %v545 = vpop.permute.xlu0 %544
      %546 = vrot.lane.b32.xlu0 %v339, 1
      %v547 = vpop.permute.xlu0 %546
      %vm548 = vcmask 7168
      %v549 = vsel %vm548, %v545, %v547
      %vm551 = vcmask 7168
      %v553 = vsel %vm551, 0, %v545
      %v555 = vunpack.c.l.bf16 %v553
      %v556 = vunpack.c.l.bf16 %v549
      %v557 = vmul.f32 %v555, %v397
      %v558 = vmul.f32 %v556, %v398
      %v559 = vpack.c.bf16 %v557, %v557
      %v560 = vpack.c.bf16 %v558, %v558
      %s561 = scalar_lea.vmem %s3, 12
      %v562 = vld [vmem:[%s561] sm:$0xf]
      %v564 = vsel %vm415, %v562, 0
      %v567 = vsel %vm419, %v559, 0
      %v570 = vsel %vm419, %v560, 0
      %572 = vmatpush.bf16.msra.mxu0 0
      %573 = vmatpush.bf16.msra.mxu0 0
      %574 = vmatpush.bf16.msra.mxu0 0
      %575 = vmatpush.bf16.msra.mxu0 0
      %576 = vmatpush.bf16.msra.mxu0 0
      %577 = vmatpush.bf16.msra.mxu0 0
      %578 = vmatpush.bf16.msra.mxu0 0
      %579 = vmatpush.bf16.msra.mxu0 %v567
      %580 = vmatmul.bf16.gmra.mxu0 %v564
      %v581 = vpop.f32.mrf.mxu0
      %v582 = vadd.f32 0.0, %v581
      %v583 = vpop.f32.mrf.mxu0
      %584 = vdwg.mxu0
      %585 = vmatpush.bf16.msra.mxu0 0
      %586 = vmatpush.bf16.msra.mxu0 0
      %587 = vmatpush.bf16.msra.mxu0 0
      %588 = vmatpush.bf16.msra.mxu0 0
      %589 = vmatpush.bf16.msra.mxu0 0
      %590 = vmatpush.bf16.msra.mxu0 0
      %591 = vmatpush.bf16.msra.mxu0 0
      %592 = vmatpush.bf16.msra.mxu0 %v570
      %593 = vmatmul.bf16.gmra.mxu0 %v564
      %v594 = vpop.f32.mrf.mxu0
      %v595 = vadd.f32 0.0, %v594
      %v596 = vpop.f32.mrf.mxu0
      %597 = vdwg.mxu0
      %v598 = vadd.f32 %v542, %v582
      %v599 = vadd.f32 %v543, %v595
      %s600 = scalar_lea.vmem %s3, 16
      %v601 = vld [vmem:[%s600] sm:$0xf]
      %v603 = vsel %vm415, %v601, 0
      %v605 = vsel %vm419, %v337, 0
      %v607 = vsel %vm419, %v339, 0
      %609 = vmatpush.bf16.msra.mxu0 0
      %610 = vmatpush.bf16.msra.mxu0 0
      %611 = vmatpush.bf16.msra.mxu0 0
      %612 = vmatpush.bf16.msra.mxu0 0
      %613 = vmatpush.bf16.msra.mxu0 0
      %614 = vmatpush.bf16.msra.mxu0 0
      %615 = vmatpush.bf16.msra.mxu0 0
      %616 = vmatpush.bf16.msra.mxu0 %v605
      %617 = vmatmul.bf16.gmra.mxu0 %v603
      %v618 = vpop.f32.mrf.mxu0
      %v619 = vadd.f32 0.0, %v618
      %v620 = vpop.f32.mrf.mxu0
      %621 = vdwg.mxu0
      %622 = vmatpush.bf16.msra.mxu0 0
      %623 = vmatpush.bf16.msra.mxu0 0
      %624 = vmatpush.bf16.msra.mxu0 0
      %625 = vmatpush.bf16.msra.mxu0 0
      %626 = vmatpush.bf16.msra.mxu0 0
      %627 = vmatpush.bf16.msra.mxu0 0
      %628 = vmatpush.bf16.msra.mxu0 0
      %629 = vmatpush.bf16.msra.mxu0 %v607
      %630 = vmatmul.bf16.gmra.mxu0 %v603
      %v631 = vpop.f32.mrf.mxu0
      %v632 = vadd.f32 0.0, %v631
      %v633 = vpop.f32.mrf.mxu0
      %634 = vdwg.mxu0
      %v635 = vadd.f32 %v598, %v619
      %v636 = vadd.f32 %v599, %v632
      %637 = vrot.lane.b32.xlu0 %v337, 127
      %v638 = vpop.permute.xlu0 %637
      %639 = vrot.lane.b32.xlu0 %v339, 127
      %v640 = vpop.permute.xlu0 %639
      %vm641 = vcmask 1039360
      %v642 = vsel %vm641, %v638, %v640
      %vm644 = vcmask 1039360
      %v646 = vsel %vm644, %v640, 0
      %v648 = vunpack.c.l.bf16 %v642
      %v649 = vunpack.c.l.bf16 %v646
      %v650 = vmul.f32 %v648, %v499
      %v651 = vmul.f32 %v649, %v500
      %v652 = vpack.c.bf16 %v650, %v650
      %v653 = vpack.c.bf16 %v651, %v651
      %s654 = scalar_lea.vmem %s3, 20
      %v655 = vld [vmem:[%s654] sm:$0xf]
      %v657 = vsel %vm415, %v655, 0
      %v660 = vsel %vm419, %v652, 0
      %v663 = vsel %vm419, %v653, 0
      %665 = vmatpush.bf16.msra.mxu0 0
      %666 = vmatpush.bf16.msra.mxu0 0
      %667 = vmatpush.bf16.msra.mxu0 0
      %668 = vmatpush.bf16.msra.mxu0 0
      %669 = vmatpush.bf16.msra.mxu0 0
      %670 = vmatpush.bf16.msra.mxu0 0
      %671 = vmatpush.bf16.msra.mxu0 0
      %672 = vmatpush.bf16.msra.mxu0 %v660
      %673 = vmatmul.bf16.gmra.mxu0 %v657
      %v674 = vpop.f32.mrf.mxu0
      %v675 = vadd.f32 0.0, %v674
      %v676 = vpop.f32.mrf.mxu0
      %677 = vdwg.mxu0
      %678 = vmatpush.bf16.msra.mxu0 0
      %679 = vmatpush.bf16.msra.mxu0 0
      %680 = vmatpush.bf16.msra.mxu0 0
      %681 = vmatpush.bf16.msra.mxu0 0
      %682 = vmatpush.bf16.msra.mxu0 0
      %683 = vmatpush.bf16.msra.mxu0 0
      %684 = vmatpush.bf16.msra.mxu0 0
      %685 = vmatpush.bf16.msra.mxu0 %v663
      %686 = vmatmul.bf16.gmra.mxu0 %v657
      %v687 = vpop.f32.mrf.mxu0
      %v688 = vadd.f32 0.0, %v687
      %v689 = vpop.f32.mrf.mxu0
      %690 = vdwg.mxu0
      %v691 = vadd.f32 %v635, %v675
      %v692 = vadd.f32 %v636, %v688
      %693 = vrot.lane.b32.xlu0 %v337, 113
      %v694 = vpop.permute.xlu0 %693
      %695 = vrot.lane.b32.xlu0 %v339, 113
      %v696 = vpop.permute.xlu0 %695
      %vm697 = vcmask 924672
      %v698 = vsel %vm697, %v694, %v696
      %vm700 = vcmask 924672
      %v702 = vsel %vm700, %v696, 0
      %v704 = vunpack.c.l.bf16 %v698
      %v705 = vunpack.c.l.bf16 %v702
      %v706 = vmul.f32 %v704, %v397
      %v707 = vmul.f32 %v705, %v398
      %v708 = vpack.c.bf16 %v706, %v706
      %v709 = vpack.c.bf16 %v707, %v707
      %s710 = scalar_lea.vmem %s3, 24
      %v711 = vld [vmem:[%s710] sm:$0xf]
      %v713 = vsel %vm415, %v711, 0
      %v716 = vsel %vm419, %v708, 0
      %v719 = vsel %vm419, %v709, 0
      %721 = vmatpush.bf16.msra.mxu0 0
      %722 = vmatpush.bf16.msra.mxu0 0
      %723 = vmatpush.bf16.msra.mxu0 0
      %724 = vmatpush.bf16.msra.mxu0 0
      %725 = vmatpush.bf16.msra.mxu0 0
      %726 = vmatpush.bf16.msra.mxu0 0
      %727 = vmatpush.bf16.msra.mxu0 0
      %728 = vmatpush.bf16.msra.mxu0 %v716
      %729 = vmatmul.bf16.gmra.mxu0 %v713
      %v730 = vpop.f32.mrf.mxu0
      %v731 = vadd.f32 0.0, %v730
      %v732 = vpop.f32.mrf.mxu0
      %733 = vdwg.mxu0
      %734 = vmatpush.bf16.msra.mxu0 0
      %735 = vmatpush.bf16.msra.mxu0 0
      %736 = vmatpush.bf16.msra.mxu0 0
      %737 = vmatpush.bf16.msra.mxu0 0
      %738 = vmatpush.bf16.msra.mxu0 0
      %739 = vmatpush.bf16.msra.mxu0 0
      %740 = vmatpush.bf16.msra.mxu0 0
      %741 = vmatpush.bf16.msra.mxu0 %v719
      %742 = vmatmul.bf16.gmra.mxu0 %v713
      %v743 = vpop.f32.mrf.mxu0
      %v744 = vadd.f32 0.0, %v743
      %v745 = vpop.f32.mrf.mxu0
      %746 = vdwg.mxu0
      %v747 = vadd.f32 %v691, %v731
      %v748 = vadd.f32 %v692, %v744
      %749 = vrot.lane.b32.xlu0 %v337, 112
      %v750 = vpop.permute.xlu0 %749
      %751 = vrot.lane.b32.xlu0 %v339, 112
      %v752 = vpop.permute.xlu0 %751
      %vm753 = vcmask 916480
      %v754 = vsel %vm753, %v750, %v752
      %vm755 = vcmask 916480
      %v757 = vsel %vm755, %v752, 0
      %s758 = scalar_lea.vmem %s3, 28
      %v759 = vld [vmem:[%s758] sm:$0xf]
      %v761 = vsel %vm415, %v759, 0
      %v764 = vsel %vm419, %v754, 0
      %v766 = vsel %vm419, %v757, 0
      %768 = vmatpush.bf16.msra.mxu0 0
      %769 = vmatpush.bf16.msra.mxu0 0
      %770 = vmatpush.bf16.msra.mxu0 0
      %771 = vmatpush.bf16.msra.mxu0 0
      %772 = vmatpush.bf16.msra.mxu0 0
      %773 = vmatpush.bf16.msra.mxu0 0
      %774 = vmatpush.bf16.msra.mxu0 0
      %775 = vmatpush.bf16.msra.mxu0 %v764
      %776 = vmatmul.bf16.gmra.mxu0 %v761
      %v777 = vpop.f32.mrf.mxu0
      %v778 = vadd.f32 0.0, %v777
      %v779 = vpop.f32.mrf.mxu0
      %780 = vdwg.mxu0
      %781 = vmatpush.bf16.msra.mxu0 0
      %782 = vmatpush.bf16.msra.mxu0 0
      %783 = vmatpush.bf16.msra.mxu0 0
      %784 = vmatpush.bf16.msra.mxu0 0
      %785 = vmatpush.bf16.msra.mxu0 0
      %786 = vmatpush.bf16.msra.mxu0 0
      %787 = vmatpush.bf16.msra.mxu0 0
      %788 = vmatpush.bf16.msra.mxu0 %v766
      %789 = vmatmul.bf16.gmra.mxu0 %v761
      %v790 = vpop.f32.mrf.mxu0
      %v791 = vadd.f32 0.0, %v790
      %v792 = vpop.f32.mrf.mxu0
      %793 = vdwg.mxu0
      %v794 = vadd.f32 %v747, %v778
      %v795 = vadd.f32 %v748, %v791
      %796 = vrot.lane.b32.xlu0 %v337, 111
      %v797 = vpop.permute.xlu0 %796
      %798 = vrot.lane.b32.xlu0 %v339, 111
      %v799 = vpop.permute.xlu0 %798
      %vm800 = vcmask 908288
      %v801 = vsel %vm800, %v797, %v799
      %vm803 = vcmask 908288
      %v805 = vsel %vm803, %v799, 0
      %v807 = vunpack.c.l.bf16 %v801
      %v808 = vunpack.c.l.bf16 %v805
      %v809 = vmul.f32 %v807, %v499
      %v810 = vmul.f32 %v808, %v500
      %v811 = vpack.c.bf16 %v809, %v809
      %v812 = vpack.c.bf16 %v810, %v810
      %s813 = scalar_lea.vmem %s3, 32
      %v814 = vld [vmem:[%s813] sm:$0xf]
      %v816 = vsel %vm415, %v814, 0
      %v819 = vsel %vm419, %v811, 0
      %v822 = vsel %vm419, %v812, 0
      %824 = vmatpush.bf16.msra.mxu0 0
      %825 = vmatpush.bf16.msra.mxu0 0
      %826 = vmatpush.bf16.msra.mxu0 0
      %827 = vmatpush.bf16.msra.mxu0 0
      %828 = vmatpush.bf16.msra.mxu0 0
      %829 = vmatpush.bf16.msra.mxu0 0
      %830 = vmatpush.bf16.msra.mxu0 0
      %831 = vmatpush.bf16.msra.mxu0 %v819
      %832 = vmatmul.bf16.gmra.mxu0 %v816
      %v833 = vpop.f32.mrf.mxu0
      %v834 = vadd.f32 0.0, %v833
      %v835 = vpop.f32.mrf.mxu0
      %836 = vdwg.mxu0
      %837 = vmatpush.bf16.msra.mxu0 0
      %838 = vmatpush.bf16.msra.mxu0 0
      %839 = vmatpush.bf16.msra.mxu0 0
      %840 = vmatpush.bf16.msra.mxu0 0
      %841 = vmatpush.bf16.msra.mxu0 0
      %842 = vmatpush.bf16.msra.mxu0 0
      %843 = vmatpush.bf16.msra.mxu0 0
      %844 = vmatpush.bf16.msra.mxu0 %v822
      %845 = vmatmul.bf16.gmra.mxu0 %v816
      %v846 = vpop.f32.mrf.mxu0
      %v847 = vadd.f32 0.0, %v846
      %v848 = vpop.f32.mrf.mxu0
      %849 = vdwg.mxu0
      %v850 = vadd.f32 %v794, %v834
      %v851 = vadd.f32 %v795, %v847
      %v852 = vadd.f32 %v850, %v851
      %853 = vadd.xlane.f32.xlu0 %v852
      %v854 = vpop.xlane.xlu0 %853
      %v855 = vrcp.pop 256.0
      %v856 = vmul.f32 256.0, %v855
      %v857 = vsub.f32 1.0, %v856
      %v858 = vmul.f32 %v855, %v857
      %v859 = vadd.f32 %v855, %v858
      %vm860 = vweird.f32 %v855
      %v861 = vsel %vm860, %v855, %v859
      %v862 = vmul.f32 %v854, %v861
      %v863 = vsub.f32 %v850, %v862
      %v864 = vsub.f32 %v851, %v862
      %v865 = vmul.f32 %v863, %v863
      %v866 = vmul.f32 %v864, %v864
      %v867 = vadd.f32 %v865, %v866
      %868 = vadd.xlane.f32.xlu0 %v867
      %v869 = vpop.xlane.xlu0 %868
      %v870 = vmul.f32 %v869, %v861
      %v871 = vadd.f32 %v870, 1e-05
      %v872 = vrsqrt.pop %v871
      %v873 = vmul.f32 %v872, %v871
      %v874 = vmul.f32 %v873, %v872
      %v875 = vmul.f32 0.5, %v874
      %v876 = vsub.f32 1.5, %v875
      %v877 = vmul.f32 %v872, %v876
      %vm878 = vweird.f32 %v871
      %vm879 = vweird.f32 %v872
      %vm880 = vmor %vm878, %vm879
      %v881 = vsel %vm880, %v872, %v877
      %v882 = vmul.f32 %v863, %v881
      %v883 = vmul.f32 %v864, %v881
      %v884 = vmax.f32 %v882, 0.0
      %v885 = vmax.f32 %v883, 0.0
      %v886 = vpack.c.bf16 %v885, %v884
      %v888 = vunpack.c.l.b16 %v886
      %v889 = vunpack.c.h.b16 %v886
      %v890 = vpack.c.b16 %v888, %v888
      %v891 = vpack.c.b16 %v889, %v889
      %892 = vrot.lane.b32.xlu0 %v890, 17
      %v893 = vpop.permute.xlu0 %892
      %894 = vrot.lane.b32.xlu0 %v891, 17
      %v895 = vpop.permute.xlu0 %894
      %v896 = vsel %vm387, %v893, %v895
      %v899 = vsel %vm390, 0, %v893
      %v901 = vunpack.c.l.bf16 %v899
      %v902 = vunpack.c.l.bf16 %v896
      %v903 = vmul.f32 %v901, %v397
      %v904 = vmul.f32 %v902, %v398
      %v905 = vpack.c.bf16 %v903, %v903
      %v906 = vpack.c.bf16 %v904, %v904
      %v907 = vld [vmem:[%s4] sm:$0xf]
      %908 = vrot.lane.b32.xlu0 %v890, 16
      %v909 = vpop.permute.xlu0 %908
      %910 = vrot.lane.b32.xlu0 %v891, 16
      %v911 = vpop.permute.xlu0 %910
      %v912 = vsel %vm408, %v909, %v911
      %v914 = vsel %vm410, 0, %v909
      %s915 = scalar_lea.vmem %s4, 4
      %v916 = vld [vmem:[%s915] sm:$0xf]
      %v918 = vsel %vm415, %v916, 0
      %v920 = vsel %vm419, %v914, 0
      %v923 = vsel %vm419, %v912, 0
      %925 = vmatpush.bf16.msra.mxu0 0
      %926 = vmatpush.bf16.msra.mxu0 0
      %927 = vmatpush.bf16.msra.mxu0 0
      %928 = vmatpush.bf16.msra.mxu0 0
      %929 = vmatpush.bf16.msra.mxu0 0
      %930 = vmatpush.bf16.msra.mxu0 0
      %931 = vmatpush.bf16.msra.mxu0 0
      %932 = vmatpush.bf16.msra.mxu0 %v920
      %933 = vmatmul.bf16.gmra.mxu0 %v918
      %v934 = vpop.f32.mrf.mxu0
      %v935 = vadd.f32 0.0, %v934
      %v936 = vpop.f32.mrf.mxu0
      %937 = vdwg.mxu0
      %938 = vmatpush.bf16.msra.mxu0 0
      %939 = vmatpush.bf16.msra.mxu0 0
      %940 = vmatpush.bf16.msra.mxu0 0
      %941 = vmatpush.bf16.msra.mxu0 0
      %942 = vmatpush.bf16.msra.mxu0 0
      %943 = vmatpush.bf16.msra.mxu0 0
      %944 = vmatpush.bf16.msra.mxu0 0
      %945 = vmatpush.bf16.msra.mxu0 %v923
      %946 = vmatmul.bf16.gmra.mxu0 %v918
      %v947 = vpop.f32.mrf.mxu0
      %v948 = vadd.f32 0.0, %v947
      %v949 = vpop.f32.mrf.mxu0
      %950 = vdwg.mxu0
      %v952 = vsel %vm415, %v907, 0
      %v955 = vsel %vm419, %v905, 0
      %v958 = vsel %vm419, %v906, 0
      %960 = vmatpush.bf16.msra.mxu0 0
      %961 = vmatpush.bf16.msra.mxu0 0
      %962 = vmatpush.bf16.msra.mxu0 0
      %963 = vmatpush.bf16.msra.mxu0 0
      %964 = vmatpush.bf16.msra.mxu0 0
      %965 = vmatpush.bf16.msra.mxu0 0
      %966 = vmatpush.bf16.msra.mxu0 0
      %967 = vmatpush.bf16.msra.mxu0 %v955
      %968 = vmatmul.bf16.gmra.mxu0 %v952
      %v969 = vpop.f32.mrf.mxu0
      %v970 = vadd.f32 %v935, %v969
      %v971 = vpop.f32.mrf.mxu0
      %972 = vdwg.mxu0
      %973 = vmatpush.bf16.msra.mxu0 0
      %974 = vmatpush.bf16.msra.mxu0 0
      %975 = vmatpush.bf16.msra.mxu0 0
      %976 = vmatpush.bf16.msra.mxu0 0
      %977 = vmatpush.bf16.msra.mxu0 0
      %978 = vmatpush.bf16.msra.mxu0 0
      %979 = vmatpush.bf16.msra.mxu0 0
      %980 = vmatpush.bf16.msra.mxu0 %v958
      %981 = vmatmul.bf16.gmra.mxu0 %v952
      %v982 = vpop.f32.mrf.mxu0
      %v983 = vadd.f32 %v948, %v982
      %v984 = vpop.f32.mrf.mxu0
      %985 = vdwg.mxu0
      %986 = vrot.lane.b32.xlu0 %v890, 15
      %v987 = vpop.permute.xlu0 %986
      %988 = vrot.lane.b32.xlu0 %v891, 15
      %v989 = vpop.permute.xlu0 %988
      %v990 = vsel %vm490, %v987, %v989
      %v993 = vsel %vm493, 0, %v987
      %v995 = vunpack.c.l.bf16 %v993
      %v996 = vunpack.c.l.bf16 %v990
      %v997 = vmul.f32 %v995, %v499
      %v998 = vmul.f32 %v996, %v500
      %v999 = vpack.c.bf16 %v997, %v997
      %v1000 = vpack.c.bf16 %v998, %v998
      %s1001 = scalar_lea.vmem %s4, 8
      %v1002 = vld [vmem:[%s1001] sm:$0xf]
      %v1004 = vsel %vm415, %v1002, 0
      %v1007 = vsel %vm419, %v999, 0
      %v1010 = vsel %vm419, %v1000, 0
      %1012 = vmatpush.bf16.msra.mxu0 0
      %1013 = vmatpush.bf16.msra.mxu0 0
      %1014 = vmatpush.bf16.msra.mxu0 0
      %1015 = vmatpush.bf16.msra.mxu0 0
      %1016 = vmatpush.bf16.msra.mxu0 0
      %1017 = vmatpush.bf16.msra.mxu0 0
      %1018 = vmatpush.bf16.msra.mxu0 0
      %1019 = vmatpush.bf16.msra.mxu0 %v1007
      %1020 = vmatmul.bf16.gmra.mxu0 %v1004
      %v1021 = vpop.f32.mrf.mxu0
      %v1022 = vadd.f32 0.0, %v1021
      %v1023 = vpop.f32.mrf.mxu0
      %1024 = vdwg.mxu0
      %1025 = vmatpush.bf16.msra.mxu0 0
      %1026 = vmatpush.bf16.msra.mxu0 0
      %1027 = vmatpush.bf16.msra.mxu0 0
      %1028 = vmatpush.bf16.msra.mxu0 0
      %1029 = vmatpush.bf16.msra.mxu0 0
      %1030 = vmatpush.bf16.msra.mxu0 0
      %1031 = vmatpush.bf16.msra.mxu0 0
      %1032 = vmatpush.bf16.msra.mxu0 %v1010
      %1033 = vmatmul.bf16.gmra.mxu0 %v1004
      %v1034 = vpop.f32.mrf.mxu0
      %v1035 = vadd.f32 0.0, %v1034
      %v1036 = vpop.f32.mrf.mxu0
      %1037 = vdwg.mxu0
      %v1038 = vadd.f32 %v970, %v1022
      %v1039 = vadd.f32 %v983, %v1035
      %1040 = vrot.lane.b32.xlu0 %v890, 1
      %v1041 = vpop.permute.xlu0 %1040
      %1042 = vrot.lane.b32.xlu0 %v891, 1
      %v1043 = vpop.permute.xlu0 %1042
      %v1044 = vsel %vm548, %v1041, %v1043
      %v1047 = vsel %vm551, 0, %v1041
      %v1049 = vunpack.c.l.bf16 %v1047
      %v1050 = vunpack.c.l.bf16 %v1044
      %v1051 = vmul.f32 %v1049, %v397
      %v1052 = vmul.f32 %v1050, %v398
      %v1053 = vpack.c.bf16 %v1051, %v1051
      %v1054 = vpack.c.bf16 %v1052, %v1052
      %s1055 = scalar_lea.vmem %s4, 12
      %v1056 = vld [vmem:[%s1055] sm:$0xf]
      %v1058 = vsel %vm415, %v1056, 0
      %v1061 = vsel %vm419, %v1053, 0
      %v1064 = vsel %vm419, %v1054, 0
      %1066 = vmatpush.bf16.msra.mxu0 0
      %1067 = vmatpush.bf16.msra.mxu0 0
      %1068 = vmatpush.bf16.msra.mxu0 0
      %1069 = vmatpush.bf16.msra.mxu0 0
      %1070 = vmatpush.bf16.msra.mxu0 0
      %1071 = vmatpush.bf16.msra.mxu0 0
      %1072 = vmatpush.bf16.msra.mxu0 0
      %1073 = vmatpush.bf16.msra.mxu0 %v1061
      %1074 = vmatmul.bf16.gmra.mxu0 %v1058
      %v1075 = vpop.f32.mrf.mxu0
      %v1076 = vadd.f32 0.0, %v1075
      %v1077 = vpop.f32.mrf.mxu0
      %1078 = vdwg.mxu0
      %1079 = vmatpush.bf16.msra.mxu0 0
      %1080 = vmatpush.bf16.msra.mxu0 0
      %1081 = vmatpush.bf16.msra.mxu0 0
      %1082 = vmatpush.bf16.msra.mxu0 0
      %1083 = vmatpush.bf16.msra.mxu0 0
      %1084 = vmatpush.bf16.msra.mxu0 0
      %1085 = vmatpush.bf16.msra.mxu0 0
      %1086 = vmatpush.bf16.msra.mxu0 %v1064
      %1087 = vmatmul.bf16.gmra.mxu0 %v1058
      %v1088 = vpop.f32.mrf.mxu0
      %v1089 = vadd.f32 0.0, %v1088
      %v1090 = vpop.f32.mrf.mxu0
      %1091 = vdwg.mxu0
      %v1092 = vadd.f32 %v1038, %v1076
      %v1093 = vadd.f32 %v1039, %v1089
      %s1094 = scalar_lea.vmem %s4, 16
      %v1095 = vld [vmem:[%s1094] sm:$0xf]
      %v1097 = vsel %vm415, %v1095, 0
      %v1100 = vsel %vm419, %v890, 0
      %v1103 = vsel %vm419, %v891, 0
      %1105 = vmatpush.bf16.msra.mxu0 0
      %1106 = vmatpush.bf16.msra.mxu0 0
      %1107 = vmatpush.bf16.msra.mxu0 0
      %1108 = vmatpush.bf16.msra.mxu0 0
      %1109 = vmatpush.bf16.msra.mxu0 0
      %1110 = vmatpush.bf16.msra.mxu0 0
      %1111 = vmatpush.bf16.msra.mxu0 0
      %1112 = vmatpush.bf16.msra.mxu0 %v1100
      %1113 = vmatmul.bf16.gmra.mxu0 %v1097
      %v1114 = vpop.f32.mrf.mxu0
      %v1115 = vadd.f32 0.0, %v1114
      %v1116 = vpop.f32.mrf.mxu0
      %1117 = vdwg.mxu0
      %1118 = vmatpush.bf16.msra.mxu0 0
      %1119 = vmatpush.bf16.msra.mxu0 0
      %1120 = vmatpush.bf16.msra.mxu0 0
      %1121 = vmatpush.bf16.msra.mxu0 0
      %1122 = vmatpush.bf16.msra.mxu0 0
      %1123 = vmatpush.bf16.msra.mxu0 0
      %1124 = vmatpush.bf16.msra.mxu0 0
      %1125 = vmatpush.bf16.msra.mxu0 %v1103
      %1126 = vmatmul.bf16.gmra.mxu0 %v1097
      %v1127 = vpop.f32.mrf.mxu0
      %v1128 = vadd.f32 0.0, %v1127
      %v1129 = vpop.f32.mrf.mxu0
      %1130 = vdwg.mxu0
      %v1131 = vadd.f32 %v1092, %v1115
      %v1132 = vadd.f32 %v1093, %v1128
      %1133 = vrot.lane.b32.xlu0 %v890, 127
      %v1134 = vpop.permute.xlu0 %1133
      %1135 = vrot.lane.b32.xlu0 %v891, 127
      %v1136 = vpop.permute.xlu0 %1135
      %v1137 = vsel %vm641, %v1134, %v1136
      %v1140 = vsel %vm644, %v1136, 0
      %v1142 = vunpack.c.l.bf16 %v1137
      %v1143 = vunpack.c.l.bf16 %v1140
      %v1144 = vmul.f32 %v1142, %v499
      %v1145 = vmul.f32 %v1143, %v500
      %v1146 = vpack.c.bf16 %v1144, %v1144
      %v1147 = vpack.c.bf16 %v1145, %v1145
      %s1148 = scalar_lea.vmem %s4, 20
      %v1149 = vld [vmem:[%s1148] sm:$0xf]
      %v1151 = vsel %vm415, %v1149, 0
      %v1154 = vsel %vm419, %v1146, 0
      %v1157 = vsel %vm419, %v1147, 0
      %1159 = vmatpush.bf16.msra.mxu0 0
      %1160 = vmatpush.bf16.msra.mxu0 0
      %1161 = vmatpush.bf16.msra.mxu0 0
      %1162 = vmatpush.bf16.msra.mxu0 0
      %1163 = vmatpush.bf16.msra.mxu0 0
      %1164 = vmatpush.bf16.msra.mxu0 0
      %1165 = vmatpush.bf16.msra.mxu0 0
      %1166 = vmatpush.bf16.msra.mxu0 %v1154
      %1167 = vmatmul.bf16.gmra.mxu0 %v1151
      %v1168 = vpop.f32.mrf.mxu0
      %v1169 = vadd.f32 0.0, %v1168
      %v1170 = vpop.f32.mrf.mxu0
      %1171 = vdwg.mxu0
      %1172 = vmatpush.bf16.msra.mxu0 0
      %1173 = vmatpush.bf16.msra.mxu0 0
      %1174 = vmatpush.bf16.msra.mxu0 0
      %1175 = vmatpush.bf16.msra.mxu0 0
      %1176 = vmatpush.bf16.msra.mxu0 0
      %1177 = vmatpush.bf16.msra.mxu0 0
      %1178 = vmatpush.bf16.msra.mxu0 0
      %1179 = vmatpush.bf16.msra.mxu0 %v1157
      %1180 = vmatmul.bf16.gmra.mxu0 %v1151
      %v1181 = vpop.f32.mrf.mxu0
      %v1182 = vadd.f32 0.0, %v1181
      %v1183 = vpop.f32.mrf.mxu0
      %1184 = vdwg.mxu0
      %v1185 = vadd.f32 %v1131, %v1169
      %v1186 = vadd.f32 %v1132, %v1182
      %1187 = vrot.lane.b32.xlu0 %v890, 113
      %v1188 = vpop.permute.xlu0 %1187
      %1189 = vrot.lane.b32.xlu0 %v891, 113
      %v1190 = vpop.permute.xlu0 %1189
      %v1191 = vsel %vm697, %v1188, %v1190
      %v1194 = vsel %vm700, %v1190, 0
      %v1196 = vunpack.c.l.bf16 %v1191
      %v1197 = vunpack.c.l.bf16 %v1194
      %v1198 = vmul.f32 %v1196, %v397
      %v1199 = vmul.f32 %v1197, %v398
      %v1200 = vpack.c.bf16 %v1198, %v1198
      %v1201 = vpack.c.bf16 %v1199, %v1199
      %s1202 = scalar_lea.vmem %s4, 24
      %v1203 = vld [vmem:[%s1202] sm:$0xf]
      %v1205 = vsel %vm415, %v1203, 0
      %v1208 = vsel %vm419, %v1200, 0
      %v1211 = vsel %vm419, %v1201, 0
      %1213 = vmatpush.bf16.msra.mxu0 0
      %1214 = vmatpush.bf16.msra.mxu0 0
      %1215 = vmatpush.bf16.msra.mxu0 0
      %1216 = vmatpush.bf16.msra.mxu0 0
      %1217 = vmatpush.bf16.msra.mxu0 0
      %1218 = vmatpush.bf16.msra.mxu0 0
      %1219 = vmatpush.bf16.msra.mxu0 0
      %1220 = vmatpush.bf16.msra.mxu0 %v1208
      %1221 = vmatmul.bf16.gmra.mxu0 %v1205
      %v1222 = vpop.f32.mrf.mxu0
      %v1223 = vadd.f32 0.0, %v1222
      %v1224 = vpop.f32.mrf.mxu0
      %1225 = vdwg.mxu0
      %1226 = vmatpush.bf16.msra.mxu0 0
      %1227 = vmatpush.bf16.msra.mxu0 0
      %1228 = vmatpush.bf16.msra.mxu0 0
      %1229 = vmatpush.bf16.msra.mxu0 0
      %1230 = vmatpush.bf16.msra.mxu0 0
      %1231 = vmatpush.bf16.msra.mxu0 0
      %1232 = vmatpush.bf16.msra.mxu0 0
      %1233 = vmatpush.bf16.msra.mxu0 %v1211
      %1234 = vmatmul.bf16.gmra.mxu0 %v1205
      %v1235 = vpop.f32.mrf.mxu0
      %v1236 = vadd.f32 0.0, %v1235
      %v1237 = vpop.f32.mrf.mxu0
      %1238 = vdwg.mxu0
      %v1239 = vadd.f32 %v1185, %v1223
      %v1240 = vadd.f32 %v1186, %v1236
      %1241 = vrot.lane.b32.xlu0 %v890, 112
      %v1242 = vpop.permute.xlu0 %1241
      %1243 = vrot.lane.b32.xlu0 %v891, 112
      %v1244 = vpop.permute.xlu0 %1243
      %v1245 = vsel %vm753, %v1242, %v1244
      %v1247 = vsel %vm755, %v1244, 0
      %s1248 = scalar_lea.vmem %s4, 28
      %v1249 = vld [vmem:[%s1248] sm:$0xf]
      %v1251 = vsel %vm415, %v1249, 0
      %v1254 = vsel %vm419, %v1245, 0
      %v1256 = vsel %vm419, %v1247, 0
      %1258 = vmatpush.bf16.msra.mxu0 0
      %1259 = vmatpush.bf16.msra.mxu0 0
      %1260 = vmatpush.bf16.msra.mxu0 0
      %1261 = vmatpush.bf16.msra.mxu0 0
      %1262 = vmatpush.bf16.msra.mxu0 0
      %1263 = vmatpush.bf16.msra.mxu0 0
      %1264 = vmatpush.bf16.msra.mxu0 0
      %1265 = vmatpush.bf16.msra.mxu0 %v1254
      %1266 = vmatmul.bf16.gmra.mxu0 %v1251
      %v1267 = vpop.f32.mrf.mxu0
      %v1268 = vadd.f32 0.0, %v1267
      %v1269 = vpop.f32.mrf.mxu0
      %1270 = vdwg.mxu0
      %1271 = vmatpush.bf16.msra.mxu0 0
      %1272 = vmatpush.bf16.msra.mxu0 0
      %1273 = vmatpush.bf16.msra.mxu0 0
      %1274 = vmatpush.bf16.msra.mxu0 0
      %1275 = vmatpush.bf16.msra.mxu0 0
      %1276 = vmatpush.bf16.msra.mxu0 0
      %1277 = vmatpush.bf16.msra.mxu0 0
      %1278 = vmatpush.bf16.msra.mxu0 %v1256
      %1279 = vmatmul.bf16.gmra.mxu0 %v1251
      %v1280 = vpop.f32.mrf.mxu0
      %v1281 = vadd.f32 0.0, %v1280
      %v1282 = vpop.f32.mrf.mxu0
      %1283 = vdwg.mxu0
      %v1284 = vadd.f32 %v1239, %v1268
      %v1285 = vadd.f32 %v1240, %v1281
      %1286 = vrot.lane.b32.xlu0 %v890, 111
      %v1287 = vpop.permute.xlu0 %1286
      %1288 = vrot.lane.b32.xlu0 %v891, 111
      %v1289 = vpop.permute.xlu0 %1288
      %v1290 = vsel %vm800, %v1287, %v1289
      %v1293 = vsel %vm803, %v1289, 0
      %v1295 = vunpack.c.l.bf16 %v1290
      %v1296 = vunpack.c.l.bf16 %v1293
      %v1297 = vmul.f32 %v1295, %v499
      %v1298 = vmul.f32 %v1296, %v500
      %v1299 = vpack.c.bf16 %v1297, %v1297
      %v1300 = vpack.c.bf16 %v1298, %v1298
      %s1301 = scalar_lea.vmem %s4, 32
      %v1302 = vld [vmem:[%s1301] sm:$0xf]
      %v1304 = vsel %vm415, %v1302, 0
      %v1307 = vsel %vm419, %v1299, 0
      %v1310 = vsel %vm419, %v1300, 0
      %1312 = vmatpush.bf16.msra.mxu0 0
      %1313 = vmatpush.bf16.msra.mxu0 0
      %1314 = vmatpush.bf16.msra.mxu0 0
      %1315 = vmatpush.bf16.msra.mxu0 0
      %1316 = vmatpush.bf16.msra.mxu0 0
      %1317 = vmatpush.bf16.msra.mxu0 0
      %1318 = vmatpush.bf16.msra.mxu0 0
      %1319 = vmatpush.bf16.msra.mxu0 %v1307
      %1320 = vmatmul.bf16.gmra.mxu0 %v1304
      %v1321 = vpop.f32.mrf.mxu0
      %v1322 = vadd.f32 0.0, %v1321
      %v1323 = vpop.f32.mrf.mxu0
      %1324 = vdwg.mxu0
      %1325 = vmatpush.bf16.msra.mxu0 0
      %1326 = vmatpush.bf16.msra.mxu0 0
      %1327 = vmatpush.bf16.msra.mxu0 0
      %1328 = vmatpush.bf16.msra.mxu0 0
      %1329 = vmatpush.bf16.msra.mxu0 0
      %1330 = vmatpush.bf16.msra.mxu0 0
      %1331 = vmatpush.bf16.msra.mxu0 0
      %1332 = vmatpush.bf16.msra.mxu0 %v1310
      %1333 = vmatmul.bf16.gmra.mxu0 %v1304
      %v1334 = vpop.f32.mrf.mxu0
      %v1335 = vadd.f32 0.0, %v1334
      %v1336 = vpop.f32.mrf.mxu0
      %1337 = vdwg.mxu0
      %v1338 = vadd.f32 %v1284, %v1322
      %v1339 = vadd.f32 %v1285, %v1335
      %v1340 = vadd.f32 %v1338, %v1339
      %1341 = vadd.xlane.f32.xlu0 %v1340
      %v1342 = vpop.xlane.xlu0 %1341
      %v1343 = vmul.f32 %v1342, %v861
      %v1344 = vsub.f32 %v1338, %v1343
      %v1345 = vsub.f32 %v1339, %v1343
      %v1346 = vmul.f32 %v1344, %v1344
      %v1347 = vmul.f32 %v1345, %v1345
      %v1348 = vadd.f32 %v1346, %v1347
      %1349 = vadd.xlane.f32.xlu0 %v1348
      %v1350 = vpop.xlane.xlu0 %1349
      %v1351 = vmul.f32 %v1350, %v861
      %v1352 = vadd.f32 %v1351, 1e-05
      %v1353 = vrsqrt.pop %v1352
      %v1354 = vmul.f32 %v1353, %v1352
      %v1355 = vmul.f32 %v1354, %v1353
      %v1356 = vmul.f32 0.5, %v1355
      %v1357 = vsub.f32 1.5, %v1356
      %v1358 = vmul.f32 %v1353, %v1357
      %vm1359 = vweird.f32 %v1352
      %vm1360 = vweird.f32 %v1353
      %vm1361 = vmor %vm1359, %vm1360
      %v1362 = vsel %vm1361, %v1353, %v1358
      %v1363 = vmul.f32 %v1344, %v1362
      %v1364 = vmul.f32 %v1345, %v1362
      %v1365 = vmax.f32 %v1363, 0.0
      %v1366 = vmax.f32 %v1364, 0.0
      %1367 = vst [vmem:[%s241] sm:$0xff] %v1365
      %1368 = vst [vmem:[%s241 + $0x8] sm:$0xff] %v1366
      %p1369 = scmp.lt.s32.totalorder %s16, 1
      %s1370 = scalar_select %p1369, %s16, 1
      %s1371 = smul.addr %s1370, 2
      %s1372 = smul.addr %s1371, 8
      %s1373 = scalar_lea.vmem %s5, %s1372
      // Predicated region
      $region41: #{upsampling_concat.1} parent=39 // pred_check
        %p1374 = pneg %p149
      $region42: #{upsampling_concat.1} parent=39 // pred_check_branch
        %1376 = sbr.rel (%p1374) target = $region44
      $region43: #{upsampling_concat.1} parent=39 // pred_region
        _
      $region44: #{upsampling_concat.1} parent=39 // pred_fallthru
        _
    $region40: #{upsampling_concat.1} parent=5 // pred_fallthru
      _
    %p1377 = scmp.le.s32.totalorder 2, %s11
    // Predicated region
    $region45: #{upsampling_concat.1} parent=5 // pred_check
      %p1378 = pneg %p1377
    $region46: #{upsampling_concat.1} parent=5 // pred_check_branch
      %1380 = sbr.rel (%p1378) target = $region48
    $region47: #{upsampling_concat.1} parent=5 // pred_region
      %s1381 = ssub.s32 %s11, 2
      // Predicated region
      $region49: #{upsampling_concat.1} parent=47 // pred_check
        %p1382 = pneg %p155
      $region50: #{upsampling_concat.1} parent=47 // pred_check_branch
        %1384 = sbr.rel (%p1382) target = $region52
      $region51: #{upsampling_concat.1} parent=47 // pred_region
        %p1385 = scmp.lt.s32.totalorder %s17, 1
        %s1386 = scalar_select %p1385, %s17, 1
        %s1387 = smul.addr %s1386, 2
        %s1388 = smul.addr %s1387, 8
        %s1389 = scalar_lea.vmem %s5, %s1388
      $region52: #{upsampling_concat.1} parent=47 // pred_fallthru
        _
    $region48: #{upsampling_concat.1} parent=5 // pred_fallthru
      _
  $region6: #{upsampling_concat.1} parent=0 // loop_footer
    %s15 = sadd.s32 1, %s11
  $region7: #{upsampling_concat.1} parent=0 // loop_footer_branch
    %10 = sbr.rel target = $region3
  $region8: #{upsampling_concat.1} parent=0 // loop_exit
    _

</llo_original>
